<compile_context>
chip_gen: v6e
topology: v6e:2x2x1
jax: 0.10.0
libtpu: 0.0.40
codegen_flags: <defaults>
</compile_context>

<pallas_src>
import jax
import jax.numpy as jnp
from jax.experimental import pallas as pl
from jax.experimental.pallas import tpu as pltpu


def _round_up(x, m):
    return (x + m - 1) // m * m


def _gkc_kernel(x_ref, kpb_ref, scale_ref, out_ref):
    # x_ref    : (M*C, ncb, tw)  VMEM  rows = flattened (m, c), lanes = points
    # kpb_ref  : (C, K, tw)      VMEM  kernel points pre-broadcast along lanes
    # scale_ref: (1, 1)          SMEM  -1 / (2 * sigma^2)
    # out_ref  : (K, ncb, tw)    VMEM  lane-dense output block
    mc, ncb, tw = x_ref.shape
    c_feat, k_pts, _ = kpb_ref.shape
    m_nb = mc // c_feat

    neg_inv = scale_ref[0, 0]
    inv_m = jnp.float32(1.0 / m_nb)

    def chunk_body(j, carry):
        # Kernel-point rows for this chunk width (tiny, loaded once per chunk).
        kp_rows = [kpb_ref[c] for c in range(c_feat)]              # each (K, tw)
        acc = jnp.zeros((k_pts, tw), jnp.float32)
        for m in range(m_nb):
            d = None
            for c in range(c_feat):
                xr = x_ref[m * c_feat + c, pl.ds(j, 1), :]         # (1, tw)
                diff = xr.astype(jnp.float32) - kp_rows[c]         # (K, tw)
                sq = diff * diff
                d = sq if d is None else d + sq
            # neighbor mean accumulated in-register; exp on full (K, tw) vregs
            acc = acc + jnp.exp(d * neg_inv)
        out_ref[:, pl.ds(j, 1), :] = (acc * inv_m)[:, None, :].astype(out_ref.dtype)
        return carry

    jax.lax.fori_loop(0, ncb, chunk_body, 0)


def gaussian_kernel_conv(neighborhoods, kernel_points, sigma, *,
                         chunk=512, chunks_per_block=8):
    """Pallas TPU implementation of GaussianKernelConv.forward.

    neighborhoods: (B, N, M, C) float  -- M neighbors, C features per point
    kernel_points: (K, C)       float
    sigma:         scalar
    returns:       (B, N, K)    float32
    """
    B, N, M, C = neighborhoods.shape
    K, C2 = kernel_points.shape
    assert C2 == C, "kernel_points feature dim must match neighborhoods"
    assert chunks_per_block % 8 == 0, "chunks_per_block must be a multiple of 8"
    R = B * N

    # Chunk width (lanes) and #chunks per DMA block: aim for ~1-4 MB x-blocks per
    # grid step while each in-register (K, chunk) slab stays at a few vregs.
    tw = max(128, chunk - chunk % 128)
    while M * C * 4 * tw * chunks_per_block > (4 << 20) and tw > 128:
        tw //= 2

    n_chunks_total = _round_up(max(R, 1), tw) // tw
    ncb = n_chunks_total if n_chunks_total <= chunks_per_block else chunks_per_block
    block_pts = ncb * tw
    Rp = _round_up(R, block_pts)
    grid = Rp // block_pts
    n_chunks = Rp // tw

    # Lane-dense layout: points on the last (lane) axis; pad to a whole block.
    x_t = neighborhoods.reshape(R, M * C).astype(jnp.float32).T        # (M*C, R)
    if Rp != R:
        x_t = jnp.pad(x_t, ((0, 0), (0, Rp - R)))
    x_t = x_t.reshape(M * C, n_chunks, tw)

    # Kernel points pre-broadcast along the lane axis (tiny; constant index_map
    # -> DMA'd once, no per-step recompute inside the kernel).
    kp_b = jnp.broadcast_to(
        kernel_points.astype(jnp.float32).T[:, :, None], (C, K, tw))

    sigma_f = jnp.asarray(sigma, jnp.float32)
    neg_inv = (-1.0 / (2.0 * sigma_f * sigma_f)).reshape(1, 1)

    out_t = pl.pallas_call(
        _gkc_kernel,
        out_shape=jax.ShapeDtypeStruct((K, n_chunks, tw), jnp.float32),
        grid_spec=pltpu.PrefetchScalarGridSpec(
            num_scalar_prefetch=0,
            grid=(grid,),
            in_specs=[
                # ~1 MB of points per grid step (M*C rows x ncb*tw lanes)
                pl.BlockSpec((M * C, ncb, tw), lambda i: (0, i, 0)),
                # kernel points, resident across the grid
                pl.BlockSpec((C, K, tw), lambda i: (0, 0, 0)),
                # -1/(2*sigma^2) scalar in SMEM
                pl.BlockSpec(memory_space=pltpu.MemorySpace.SMEM),
            ],
            # lane-dense output block: last dim is a multiple of 128
            out_specs=pl.BlockSpec((K, ncb, tw), lambda i: (0, i, 0)),
        ),
        compiler_params=pltpu.CompilerParams(
            dimension_semantics=("parallel",),
        ),
    )(x_t, kp_b, neg_inv)

    out = out_t.reshape(K, Rp)[:, :R].T.reshape(B, N, K)
    return out


def _reference(neighborhoods, kernel_points, sigma):
    # Direct transcription of the PyTorch forward (broadcast / reduce).
    diff = neighborhoods[:, :, :, None, :] - kernel_points[None, None, None, :, :]
    dist_sq = jnp.sum(diff ** 2, axis=-1)
    corr = jnp.exp(-dist_sq / (2.0 * sigma ** 2))
    return corr.mean(axis=2)


if __name__ == "__main__":
    # Small shapes consistent with the module: batch=2, points=8, neighbors=16,
    # in_features=4, num_kernel_points=8.
    B, N, M, C, K = 2, 8, 16, 4, 8

    key = jax.random.PRNGKey(0)
    k_nb, k_kp = jax.random.split(key)

    neighborhoods = jax.random.normal(k_nb, (B, N, M, C), dtype=jnp.float32)
    kernel_points = jax.random.normal(k_kp, (K, C), dtype=jnp.float32)
    sigma = jnp.float32(1.0)

    out = gaussian_kernel_conv(neighborhoods, kernel_points, sigma)
    out = jax.block_until_ready(out)

    ref = _reference(neighborhoods, kernel_points, sigma)
    assert out.shape == (B, N, K), out.shape
    assert jnp.allclose(out, ref, rtol=1e-4, atol=1e-5), float(
        jnp.max(jnp.abs(out - ref))
    )

    print("KERNEL_OK")
</pallas_src>

<mosaic_0001>
module attributes {stable_mosaic.version = 11 : i64} {
  func.func @_gkc_kernel(%arg0: i32, %arg1: memref<64x1x512xf32, #tpu.memory_space<vmem>>, %arg2: memref<4x8x512xf32, #tpu.memory_space<vmem>>, %arg3: memref<1x1xf32, #tpu.memory_space<smem>>, %arg4: memref<8x1x512xf32, #tpu.memory_space<vmem>>) attributes {dimension_semantics = [#tpu.dimension_semantics<parallel>], iteration_bounds = array<i64: 1>, scalar_prefetch = 0 : i64, scratch_operands = 0 : i64, tpu.core_type = #tpu.core_type<tc>, window_params = [{transform_indices = @transform_0, window_bounds = array<i64: 64, 1, 512>}, {pipeline_mode = #tpu.pipeline_mode<synchronous>, transform_indices = @transform_1, window_bounds = array<i64: 4, 8, 512>}, {transform_indices = @transform_2, window_bounds = array<i64: 1, 1>}, {transform_indices = @transform_3, window_bounds = array<i64: 8, 1, 512>}]} {
    %c0 = arith.constant 0 : index
    %c0_0 = arith.constant 0 : index
    %0 = memref.load %arg3[%c0, %c0_0] : memref<1x1xf32, #tpu.memory_space<smem>>
    %cst = arith.constant 6.250000e-02 : f32
    %c0_i32 = arith.constant 0 : i32
    %c0_1 = arith.constant 0 : index
    %c0_2 = arith.constant 0 : index
    %c0_3 = arith.constant 0 : index
    %1 = vector.load %arg2[%c0_1, %c0_2, %c0_3] : memref<4x8x512xf32, #tpu.memory_space<vmem>>, vector<1x8x512xf32>
    %2 = vector.shape_cast %1 : vector<1x8x512xf32> to vector<8x512xf32>
    %c1 = arith.constant 1 : index
    %c0_4 = arith.constant 0 : index
    %c0_5 = arith.constant 0 : index
    %3 = vector.load %arg2[%c1, %c0_4, %c0_5] : memref<4x8x512xf32, #tpu.memory_space<vmem>>, vector<1x8x512xf32>
    %4 = vector.shape_cast %3 : vector<1x8x512xf32> to vector<8x512xf32>
    %c2 = arith.constant 2 : index
    %c0_6 = arith.constant 0 : index
    %c0_7 = arith.constant 0 : index
    %5 = vector.load %arg2[%c2, %c0_6, %c0_7] : memref<4x8x512xf32, #tpu.memory_space<vmem>>, vector<1x8x512xf32>
    %6 = vector.shape_cast %5 : vector<1x8x512xf32> to vector<8x512xf32>
    %c3 = arith.constant 3 : index
    %c0_8 = arith.constant 0 : index
    %c0_9 = arith.constant 0 : index
    %7 = vector.load %arg2[%c3, %c0_8, %c0_9] : memref<4x8x512xf32, #tpu.memory_space<vmem>>, vector<1x8x512xf32>
    %8 = vector.shape_cast %7 : vector<1x8x512xf32> to vector<8x512xf32>
    %cst_10 = arith.constant 0.000000e+00 : f32
    %9 = vector.broadcast %cst_10 : f32 to vector<8x512xf32>
    %c0_11 = arith.constant 0 : index
    %10 = arith.index_cast %c0_i32 : i32 to index
    %c0_12 = arith.constant 0 : index
    %11 = vector.load %arg1[%c0_11, %10, %c0_12] : memref<64x1x512xf32, #tpu.memory_space<vmem>>, vector<1x1x512xf32>
    %12 = vector.shape_cast %11 : vector<1x1x512xf32> to vector<1x512xf32>
    %13 = vector.broadcast %12 : vector<1x512xf32> to vector<8x512xf32>
    %14 = arith.subf %13, %2 : vector<8x512xf32>
    %15 = arith.mulf %14, %14 : vector<8x512xf32>
    %c1_13 = arith.constant 1 : index
    %16 = arith.index_cast %c0_i32 : i32 to index
    %c0_14 = arith.constant 0 : index
    %17 = vector.load %arg1[%c1_13, %16, %c0_14] : memref<64x1x512xf32, #tpu.memory_space<vmem>>, vector<1x1x512xf32>
    %18 = vector.shape_cast %17 : vector<1x1x512xf32> to vector<1x512xf32>
    %19 = vector.broadcast %18 : vector<1x512xf32> to vector<8x512xf32>
    %20 = arith.subf %19, %4 : vector<8x512xf32>
    %21 = arith.mulf %20, %20 : vector<8x512xf32>
    %22 = arith.addf %15, %21 : vector<8x512xf32>
    %c2_15 = arith.constant 2 : index
    %23 = arith.index_cast %c0_i32 : i32 to index
    %c0_16 = arith.constant 0 : index
    %24 = vector.load %arg1[%c2_15, %23, %c0_16] : memref<64x1x512xf32, #tpu.memory_space<vmem>>, vector<1x1x512xf32>
    %25 = vector.shape_cast %24 : vector<1x1x512xf32> to vector<1x512xf32>
    %26 = vector.broadcast %25 : vector<1x512xf32> to vector<8x512xf32>
    %27 = arith.subf %26, %6 : vector<8x512xf32>
    %28 = arith.mulf %27, %27 : vector<8x512xf32>
    %29 = arith.addf %22, %28 : vector<8x512xf32>
    %c3_17 = arith.constant 3 : index
    %30 = arith.index_cast %c0_i32 : i32 to index
    %c0_18 = arith.constant 0 : index
    %31 = vector.load %arg1[%c3_17, %30, %c0_18] : memref<64x1x512xf32, #tpu.memory_space<vmem>>, vector<1x1x512xf32>
    %32 = vector.shape_cast %31 : vector<1x1x512xf32> to vector<1x512xf32>
    %33 = vector.broadcast %32 : vector<1x512xf32> to vector<8x512xf32>
    %34 = arith.subf %33, %8 : vector<8x512xf32>
    %35 = arith.mulf %34, %34 : vector<8x512xf32>
    %36 = arith.addf %29, %35 : vector<8x512xf32>
    %37 = vector.broadcast %0 : f32 to vector<8x512xf32>
    %38 = arith.mulf %36, %37 : vector<8x512xf32>
    %39 = math.exp %38 : vector<8x512xf32>
    %40 = arith.addf %9, %39 : vector<8x512xf32>
    %c4 = arith.constant 4 : index
    %41 = arith.index_cast %c0_i32 : i32 to index
    %c0_19 = arith.constant 0 : index
    %42 = vector.load %arg1[%c4, %41, %c0_19] : memref<64x1x512xf32, #tpu.memory_space<vmem>>, vector<1x1x512xf32>
    %43 = vector.shape_cast %42 : vector<1x1x512xf32> to vector<1x512xf32>
    %44 = vector.broadcast %43 : vector<1x512xf32> to vector<8x512xf32>
    %45 = arith.subf %44, %2 : vector<8x512xf32>
    %46 = arith.mulf %45, %45 : vector<8x512xf32>
    %c5 = arith.constant 5 : index
    %47 = arith.index_cast %c0_i32 : i32 to index
    %c0_20 = arith.constant 0 : index
    %48 = vector.load %arg1[%c5, %47, %c0_20] : memref<64x1x512xf32, #tpu.memory_space<vmem>>, vector<1x1x512xf32>
    %49 = vector.shape_cast %48 : vector<1x1x512xf32> to vector<1x512xf32>
    %50 = vector.broadcast %49 : vector<1x512xf32> to vector<8x512xf32>
    %51 = arith.subf %50, %4 : vector<8x512xf32>
    %52 = arith.mulf %51, %51 : vector<8x512xf32>
    %53 = arith.addf %46, %52 : vector<8x512xf32>
    %c6 = arith.constant 6 : index
    %54 = arith.index_cast %c0_i32 : i32 to index
    %c0_21 = arith.constant 0 : index
    %55 = vector.load %arg1[%c6, %54, %c0_21] : memref<64x1x512xf32, #tpu.memory_space<vmem>>, vector<1x1x512xf32>
    %56 = vector.shape_cast %55 : vector<1x1x512xf32> to vector<1x512xf32>
    %57 = vector.broadcast %56 : vector<1x512xf32> to vector<8x512xf32>
    %58 = arith.subf %57, %6 : vector<8x512xf32>
    %59 = arith.mulf %58, %58 : vector<8x512xf32>
    %60 = arith.addf %53, %59 : vector<8x512xf32>
    %c7 = arith.constant 7 : index
    %61 = arith.index_cast %c0_i32 : i32 to index
    %c0_22 = arith.constant 0 : index
    %62 = vector.load %arg1[%c7, %61, %c0_22] : memref<64x1x512xf32, #tpu.memory_space<vmem>>, vector<1x1x512xf32>
    %63 = vector.shape_cast %62 : vector<1x1x512xf32> to vector<1x512xf32>
    %64 = vector.broadcast %63 : vector<1x512xf32> to vector<8x512xf32>
    %65 = arith.subf %64, %8 : vector<8x512xf32>
    %66 = arith.mulf %65, %65 : vector<8x512xf32>
    %67 = arith.addf %60, %66 : vector<8x512xf32>
    %68 = vector.broadcast %0 : f32 to vector<8x512xf32>
    %69 = arith.mulf %67, %68 : vector<8x512xf32>
    %70 = math.exp %69 : vector<8x512xf32>
    %71 = arith.addf %40, %70 : vector<8x512xf32>
    %c8 = arith.constant 8 : index
    %72 = arith.index_cast %c0_i32 : i32 to index
    %c0_23 = arith.constant 0 : index
    %73 = vector.load %arg1[%c8, %72, %c0_23] : memref<64x1x512xf32, #tpu.memory_space<vmem>>, vector<1x1x512xf32>
    %74 = vector.shape_cast %73 : vector<1x1x512xf32> to vector<1x512xf32>
    %75 = vector.broadcast %74 : vector<1x512xf32> to vector<8x512xf32>
    %76 = arith.subf %75, %2 : vector<8x512xf32>
    %77 = arith.mulf %76, %76 : vector<8x512xf32>
    %c9 = arith.constant 9 : index
    %78 = arith.index_cast %c0_i32 : i32 to index
    %c0_24 = arith.constant 0 : index
    %79 = vector.load %arg1[%c9, %78, %c0_24] : memref<64x1x512xf32, #tpu.memory_space<vmem>>, vector<1x1x512xf32>
    %80 = vector.shape_cast %79 : vector<1x1x512xf32> to vector<1x512xf32>
    %81 = vector.broadcast %80 : vector<1x512xf32> to vector<8x512xf32>
    %82 = arith.subf %81, %4 : vector<8x512xf32>
    %83 = arith.mulf %82, %82 : vector<8x512xf32>
    %84 = arith.addf %77, %83 : vector<8x512xf32>
    %c10 = arith.constant 10 : index
    %85 = arith.index_cast %c0_i32 : i32 to index
    %c0_25 = arith.constant 0 : index
    %86 = vector.load %arg1[%c10, %85, %c0_25] : memref<64x1x512xf32, #tpu.memory_space<vmem>>, vector<1x1x512xf32>
    %87 = vector.shape_cast %86 : vector<1x1x512xf32> to vector<1x512xf32>
    %88 = vector.broadcast %87 : vector<1x512xf32> to vector<8x512xf32>
    %89 = arith.subf %88, %6 : vector<8x512xf32>
    %90 = arith.mulf %89, %89 : vector<8x512xf32>
    %91 = arith.addf %84, %90 : vector<8x512xf32>
    %c11 = arith.constant 11 : index
    %92 = arith.index_cast %c0_i32 : i32 to index
    %c0_26 = arith.constant 0 : index
    %93 = vector.load %arg1[%c11, %92, %c0_26] : memref<64x1x512xf32, #tpu.memory_space<vmem>>, vector<1x1x512xf32>
    %94 = vector.shape_cast %93 : vector<1x1x512xf32> to vector<1x512xf32>
    %95 = vector.broadcast %94 : vector<1x512xf32> to vector<8x512xf32>
    %96 = arith.subf %95, %8 : vector<8x512xf32>
    %97 = arith.mulf %96, %96 : vector<8x512xf32>
    %98 = arith.addf %91, %97 : vector<8x512xf32>
    %99 = vector.broadcast %0 : f32 to vector<8x512xf32>
    %100 = arith.mulf %98, %99 : vector<8x512xf32>
    %101 = math.exp %100 : vector<8x512xf32>
    %102 = arith.addf %71, %101 : vector<8x512xf32>
    %c12 = arith.constant 12 : index
    %103 = arith.index_cast %c0_i32 : i32 to index
    %c0_27 = arith.constant 0 : index
    %104 = vector.load %arg1[%c12, %103, %c0_27] : memref<64x1x512xf32, #tpu.memory_space<vmem>>, vector<1x1x512xf32>
    %105 = vector.shape_cast %104 : vector<1x1x512xf32> to vector<1x512xf32>
    %106 = vector.broadcast %105 : vector<1x512xf32> to vector<8x512xf32>
    %107 = arith.subf %106, %2 : vector<8x512xf32>
    %108 = arith.mulf %107, %107 : vector<8x512xf32>
    %c13 = arith.constant 13 : index
    %109 = arith.index_cast %c0_i32 : i32 to index
    %c0_28 = arith.constant 0 : index
    %110 = vector.load %arg1[%c13, %109, %c0_28] : memref<64x1x512xf32, #tpu.memory_space<vmem>>, vector<1x1x512xf32>
    %111 = vector.shape_cast %110 : vector<1x1x512xf32> to vector<1x512xf32>
    %112 = vector.broadcast %111 : vector<1x512xf32> to vector<8x512xf32>
    %113 = arith.subf %112, %4 : vector<8x512xf32>
    %114 = arith.mulf %113, %113 : vector<8x512xf32>
    %115 = arith.addf %108, %114 : vector<8x512xf32>
    %c14 = arith.constant 14 : index
    %116 = arith.index_cast %c0_i32 : i32 to index
    %c0_29 = arith.constant 0 : index
    %117 = vector.load %arg1[%c14, %116, %c0_29] : memref<64x1x512xf32, #tpu.memory_space<vmem>>, vector<1x1x512xf32>
    %118 = vector.shape_cast %117 : vector<1x1x512xf32> to vector<1x512xf32>
    %119 = vector.broadcast %118 : vector<1x512xf32> to vector<8x512xf32>
    %120 = arith.subf %119, %6 : vector<8x512xf32>
    %121 = arith.mulf %120, %120 : vector<8x512xf32>
    %122 = arith.addf %115, %121 : vector<8x512xf32>
    %c15 = arith.constant 15 : index
    %123 = arith.index_cast %c0_i32 : i32 to index
    %c0_30 = arith.constant 0 : index
    %124 = vector.load %arg1[%c15, %123, %c0_30] : memref<64x1x512xf32, #tpu.memory_space<vmem>>, vector<1x1x512xf32>
    %125 = vector.shape_cast %124 : vector<1x1x512xf32> to vector<1x512xf32>
    %126 = vector.broadcast %125 : vector<1x512xf32> to vector<8x512xf32>
    %127 = arith.subf %126, %8 : vector<8x512xf32>
    %128 = arith.mulf %127, %127 : vector<8x512xf32>
    %129 = arith.addf %122, %128 : vector<8x512xf32>
    %130 = vector.broadcast %0 : f32 to vector<8x512xf32>
    %131 = arith.mulf %129, %130 : vector<8x512xf32>
    %132 = math.exp %131 : vector<8x512xf32>
    %133 = arith.addf %102, %132 : vector<8x512xf32>
    %c16 = arith.constant 16 : index
    %134 = arith.index_cast %c0_i32 : i32 to index
    %c0_31 = arith.constant 0 : index
    %135 = vector.load %arg1[%c16, %134, %c0_31] : memref<64x1x512xf32, #tpu.memory_space<vmem>>, vector<1x1x512xf32>
    %136 = vector.shape_cast %135 : vector<1x1x512xf32> to vector<1x512xf32>
    %137 = vector.broadcast %136 : vector<1x512xf32> to vector<8x512xf32>
    %138 = arith.subf %137, %2 : vector<8x512xf32>
    %139 = arith.mulf %138, %138 : vector<8x512xf32>
    %c17 = arith.constant 17 : index
    %140 = arith.index_cast %c0_i32 : i32 to index
    %c0_32 = arith.constant 0 : index
    %141 = vector.load %arg1[%c17, %140, %c0_32] : memref<64x1x512xf32, #tpu.memory_space<vmem>>, vector<1x1x512xf32>
    %142 = vector.shape_cast %141 : vector<1x1x512xf32> to vector<1x512xf32>
    %143 = vector.broadcast %142 : vector<1x512xf32> to vector<8x512xf32>
    %144 = arith.subf %143, %4 : vector<8x512xf32>
    %145 = arith.mulf %144, %144 : vector<8x512xf32>
    %146 = arith.addf %139, %145 : vector<8x512xf32>
    %c18 = arith.constant 18 : index
    %147 = arith.index_cast %c0_i32 : i32 to index
    %c0_33 = arith.constant 0 : index
    %148 = vector.load %arg1[%c18, %147, %c0_33] : memref<64x1x512xf32, #tpu.memory_space<vmem>>, vector<1x1x512xf32>
    %149 = vector.shape_cast %148 : vector<1x1x512xf32> to vector<1x512xf32>
    %150 = vector.broadcast %149 : vector<1x512xf32> to vector<8x512xf32>
    %151 = arith.subf %150, %6 : vector<8x512xf32>
    %152 = arith.mulf %151, %151 : vector<8x512xf32>
    %153 = arith.addf %146, %152 : vector<8x512xf32>
    %c19 = arith.constant 19 : index
    %154 = arith.index_cast %c0_i32 : i32 to index
    %c0_34 = arith.constant 0 : index
    %155 = vector.load %arg1[%c19, %154, %c0_34] : memref<64x1x512xf32, #tpu.memory_space<vmem>>, vector<1x1x512xf32>
    %156 = vector.shape_cast %155 : vector<1x1x512xf32> to vector<1x512xf32>
    %157 = vector.broadcast %156 : vector<1x512xf32> to vector<8x512xf32>
    %158 = arith.subf %157, %8 : vector<8x512xf32>
    %159 = arith.mulf %158, %158 : vector<8x512xf32>
    %160 = arith.addf %153, %159 : vector<8x512xf32>
    %161 = vector.broadcast %0 : f32 to vector<8x512xf32>
    %162 = arith.mulf %160, %161 : vector<8x512xf32>
    %163 = math.exp %162 : vector<8x512xf32>
    %164 = arith.addf %133, %163 : vector<8x512xf32>
    %c20 = arith.constant 20 : index
    %165 = arith.index_cast %c0_i32 : i32 to index
    %c0_35 = arith.constant 0 : index
    %166 = vector.load %arg1[%c20, %165, %c0_35] : memref<64x1x512xf32, #tpu.memory_space<vmem>>, vector<1x1x512xf32>
    %167 = vector.shape_cast %166 : vector<1x1x512xf32> to vector<1x512xf32>
    %168 = vector.broadcast %167 : vector<1x512xf32> to vector<8x512xf32>
    %169 = arith.subf %168, %2 : vector<8x512xf32>
    %170 = arith.mulf %169, %169 : vector<8x512xf32>
    %c21 = arith.constant 21 : index
    %171 = arith.index_cast %c0_i32 : i32 to index
    %c0_36 = arith.constant 0 : index
    %172 = vector.load %arg1[%c21, %171, %c0_36] : memref<64x1x512xf32, #tpu.memory_space<vmem>>, vector<1x1x512xf32>
    %173 = vector.shape_cast %172 : vector<1x1x512xf32> to vector<1x512xf32>
    %174 = vector.broadcast %173 : vector<1x512xf32> to vector<8x512xf32>
    %175 = arith.subf %174, %4 : vector<8x512xf32>
    %176 = arith.mulf %175, %175 : vector<8x512xf32>
    %177 = arith.addf %170, %176 : vector<8x512xf32>
    %c22 = arith.constant 22 : index
    %178 = arith.index_cast %c0_i32 : i32 to index
    %c0_37 = arith.constant 0 : index
    %179 = vector.load %arg1[%c22, %178, %c0_37] : memref<64x1x512xf32, #tpu.memory_space<vmem>>, vector<1x1x512xf32>
    %180 = vector.shape_cast %179 : vector<1x1x512xf32> to vector<1x512xf32>
    %181 = vector.broadcast %180 : vector<1x512xf32> to vector<8x512xf32>
    %182 = arith.subf %181, %6 : vector<8x512xf32>
    %183 = arith.mulf %182, %182 : vector<8x512xf32>
    %184 = arith.addf %177, %183 : vector<8x512xf32>
    %c23 = arith.constant 23 : index
    %185 = arith.index_cast %c0_i32 : i32 to index
    %c0_38 = arith.constant 0 : index
    %186 = vector.load %arg1[%c23, %185, %c0_38] : memref<64x1x512xf32, #tpu.memory_space<vmem>>, vector<1x1x512xf32>
    %187 = vector.shape_cast %186 : vector<1x1x512xf32> to vector<1x512xf32>
    %188 = vector.broadcast %187 : vector<1x512xf32> to vector<8x512xf32>
    %189 = arith.subf %188, %8 : vector<8x512xf32>
    %190 = arith.mulf %189, %189 : vector<8x512xf32>
    %191 = arith.addf %184, %190 : vector<8x512xf32>
    %192 = vector.broadcast %0 : f32 to vector<8x512xf32>
    %193 = arith.mulf %191, %192 : vector<8x512xf32>
    %194 = math.exp %193 : vector<8x512xf32>
    %195 = arith.addf %164, %194 : vector<8x512xf32>
    %c24 = arith.constant 24 : index
    %196 = arith.index_cast %c0_i32 : i32 to index
    %c0_39 = arith.constant 0 : index
    %197 = vector.load %arg1[%c24, %196, %c0_39] : memref<64x1x512xf32, #tpu.memory_space<vmem>>, vector<1x1x512xf32>
    %198 = vector.shape_cast %197 : vector<1x1x512xf32> to vector<1x512xf32>
    %199 = vector.broadcast %198 : vector<1x512xf32> to vector<8x512xf32>
    %200 = arith.subf %199, %2 : vector<8x512xf32>
    %201 = arith.mulf %200, %200 : vector<8x512xf32>
    %c25 = arith.constant 25 : index
    %202 = arith.index_cast %c0_i32 : i32 to index
    %c0_40 = arith.constant 0 : index
    %203 = vector.load %arg1[%c25, %202, %c0_40] : memref<64x1x512xf32, #tpu.memory_space<vmem>>, vector<1x1x512xf32>
    %204 = vector.shape_cast %203 : vector<1x1x512xf32> to vector<1x512xf32>
    %205 = vector.broadcast %204 : vector<1x512xf32> to vector<8x512xf32>
    %206 = arith.subf %205, %4 : vector<8x512xf32>
    %207 = arith.mulf %206, %206 : vector<8x512xf32>
    %208 = arith.addf %201, %207 : vector<8x512xf32>
    %c26 = arith.constant 26 : index
    %209 = arith.index_cast %c0_i32 : i32 to index
    %c0_41 = arith.constant 0 : index
    %210 = vector.load %arg1[%c26, %209, %c0_41] : memref<64x1x512xf32, #tpu.memory_space<vmem>>, vector<1x1x512xf32>
    %211 = vector.shape_cast %210 : vector<1x1x512xf32> to vector<1x512xf32>
    %212 = vector.broadcast %211 : vector<1x512xf32> to vector<8x512xf32>
    %213 = arith.subf %212, %6 : vector<8x512xf32>
    %214 = arith.mulf %213, %213 : vector<8x512xf32>
    %215 = arith.addf %208, %214 : vector<8x512xf32>
    %c27 = arith.constant 27 : index
    %216 = arith.index_cast %c0_i32 : i32 to index
    %c0_42 = arith.constant 0 : index
    %217 = vector.load %arg1[%c27, %216, %c0_42] : memref<64x1x512xf32, #tpu.memory_space<vmem>>, vector<1x1x512xf32>
    %218 = vector.shape_cast %217 : vector<1x1x512xf32> to vector<1x512xf32>
    %219 = vector.broadcast %218 : vector<1x512xf32> to vector<8x512xf32>
    %220 = arith.subf %219, %8 : vector<8x512xf32>
    %221 = arith.mulf %220, %220 : vector<8x512xf32>
    %222 = arith.addf %215, %221 : vector<8x512xf32>
    %223 = vector.broadcast %0 : f32 to vector<8x512xf32>
    %224 = arith.mulf %222, %223 : vector<8x512xf32>
    %225 = math.exp %224 : vector<8x512xf32>
    %226 = arith.addf %195, %225 : vector<8x512xf32>
    %c28 = arith.constant 28 : index
    %227 = arith.index_cast %c0_i32 : i32 to index
    %c0_43 = arith.constant 0 : index
    %228 = vector.load %arg1[%c28, %227, %c0_43] : memref<64x1x512xf32, #tpu.memory_space<vmem>>, vector<1x1x512xf32>
    %229 = vector.shape_cast %228 : vector<1x1x512xf32> to vector<1x512xf32>
    %230 = vector.broadcast %229 : vector<1x512xf32> to vector<8x512xf32>
    %231 = arith.subf %230, %2 : vector<8x512xf32>
    %232 = arith.mulf %231, %231 : vector<8x512xf32>
    %c29 = arith.constant 29 : index
    %233 = arith.index_cast %c0_i32 : i32 to index
    %c0_44 = arith.constant 0 : index
    %234 = vector.load %arg1[%c29, %233, %c0_44] : memref<64x1x512xf32, #tpu.memory_space<vmem>>, vector<1x1x512xf32>
    %235 = vector.shape_cast %234 : vector<1x1x512xf32> to vector<1x512xf32>
    %236 = vector.broadcast %235 : vector<1x512xf32> to vector<8x512xf32>
    %237 = arith.subf %236, %4 : vector<8x512xf32>
    %238 = arith.mulf %237, %237 : vector<8x512xf32>
    %239 = arith.addf %232, %238 : vector<8x512xf32>
    %c30 = arith.constant 30 : index
    %240 = arith.index_cast %c0_i32 : i32 to index
    %c0_45 = arith.constant 0 : index
    %241 = vector.load %arg1[%c30, %240, %c0_45] : memref<64x1x512xf32, #tpu.memory_space<vmem>>, vector<1x1x512xf32>
    %242 = vector.shape_cast %241 : vector<1x1x512xf32> to vector<1x512xf32>
    %243 = vector.broadcast %242 : vector<1x512xf32> to vector<8x512xf32>
    %244 = arith.subf %243, %6 : vector<8x512xf32>
    %245 = arith.mulf %244, %244 : vector<8x512xf32>
    %246 = arith.addf %239, %245 : vector<8x512xf32>
    %c31 = arith.constant 31 : index
    %247 = arith.index_cast %c0_i32 : i32 to index
    %c0_46 = arith.constant 0 : index
    %248 = vector.load %arg1[%c31, %247, %c0_46] : memref<64x1x512xf32, #tpu.memory_space<vmem>>, vector<1x1x512xf32>
    %249 = vector.shape_cast %248 : vector<1x1x512xf32> to vector<1x512xf32>
    %250 = vector.broadcast %249 : vector<1x512xf32> to vector<8x512xf32>
    %251 = arith.subf %250, %8 : vector<8x512xf32>
    %252 = arith.mulf %251, %251 : vector<8x512xf32>
    %253 = arith.addf %246, %252 : vector<8x512xf32>
    %254 = vector.broadcast %0 : f32 to vector<8x512xf32>
    %255 = arith.mulf %253, %254 : vector<8x512xf32>
    %256 = math.exp %255 : vector<8x512xf32>
    %257 = arith.addf %226, %256 : vector<8x512xf32>
    %c32 = arith.constant 32 : index
    %258 = arith.index_cast %c0_i32 : i32 to index
    %c0_47 = arith.constant 0 : index
    %259 = vector.load %arg1[%c32, %258, %c0_47] : memref<64x1x512xf32, #tpu.memory_space<vmem>>, vector<1x1x512xf32>
    %260 = vector.shape_cast %259 : vector<1x1x512xf32> to vector<1x512xf32>
    %261 = vector.broadcast %260 : vector<1x512xf32> to vector<8x512xf32>
    %262 = arith.subf %261, %2 : vector<8x512xf32>
    %263 = arith.mulf %262, %262 : vector<8x512xf32>
    %c33 = arith.constant 33 : index
    %264 = arith.index_cast %c0_i32 : i32 to index
    %c0_48 = arith.constant 0 : index
    %265 = vector.load %arg1[%c33, %264, %c0_48] : memref<64x1x512xf32, #tpu.memory_space<vmem>>, vector<1x1x512xf32>
    %266 = vector.shape_cast %265 : vector<1x1x512xf32> to vector<1x512xf32>
    %267 = vector.broadcast %266 : vector<1x512xf32> to vector<8x512xf32>
    %268 = arith.subf %267, %4 : vector<8x512xf32>
    %269 = arith.mulf %268, %268 : vector<8x512xf32>
    %270 = arith.addf %263, %269 : vector<8x512xf32>
    %c34 = arith.constant 34 : index
    %271 = arith.index_cast %c0_i32 : i32 to index
    %c0_49 = arith.constant 0 : index
    %272 = vector.load %arg1[%c34, %271, %c0_49] : memref<64x1x512xf32, #tpu.memory_space<vmem>>, vector<1x1x512xf32>
    %273 = vector.shape_cast %272 : vector<1x1x512xf32> to vector<1x512xf32>
    %274 = vector.broadcast %273 : vector<1x512xf32> to vector<8x512xf32>
    %275 = arith.subf %274, %6 : vector<8x512xf32>
    %276 = arith.mulf %275, %275 : vector<8x512xf32>
    %277 = arith.addf %270, %276 : vector<8x512xf32>
    %c35 = arith.constant 35 : index
    %278 = arith.index_cast %c0_i32 : i32 to index
    %c0_50 = arith.constant 0 : index
    %279 = vector.load %arg1[%c35, %278, %c0_50] : memref<64x1x512xf32, #tpu.memory_space<vmem>>, vector<1x1x512xf32>
    %280 = vector.shape_cast %279 : vector<1x1x512xf32> to vector<1x512xf32>
    %281 = vector.broadcast %280 : vector<1x512xf32> to vector<8x512xf32>
    %282 = arith.subf %281, %8 : vector<8x512xf32>
    %283 = arith.mulf %282, %282 : vector<8x512xf32>
    %284 = arith.addf %277, %283 : vector<8x512xf32>
    %285 = vector.broadcast %0 : f32 to vector<8x512xf32>
    %286 = arith.mulf %284, %285 : vector<8x512xf32>
    %287 = math.exp %286 : vector<8x512xf32>
    %288 = arith.addf %257, %287 : vector<8x512xf32>
    %c36 = arith.constant 36 : index
    %289 = arith.index_cast %c0_i32 : i32 to index
    %c0_51 = arith.constant 0 : index
    %290 = vector.load %arg1[%c36, %289, %c0_51] : memref<64x1x512xf32, #tpu.memory_space<vmem>>, vector<1x1x512xf32>
    %291 = vector.shape_cast %290 : vector<1x1x512xf32> to vector<1x512xf32>
    %292 = vector.broadcast %291 : vector<1x512xf32> to vector<8x512xf32>
    %293 = arith.subf %292, %2 : vector<8x512xf32>
    %294 = arith.mulf %293, %293 : vector<8x512xf32>
    %c37 = arith.constant 37 : index
    %295 = arith.index_cast %c0_i32 : i32 to index
    %c0_52 = arith.constant 0 : index
    %296 = vector.load %arg1[%c37, %295, %c0_52] : memref<64x1x512xf32, #tpu.memory_space<vmem>>, vector<1x1x512xf32>
    %297 = vector.shape_cast %296 : vector<1x1x512xf32> to vector<1x512xf32>
    %298 = vector.broadcast %297 : vector<1x512xf32> to vector<8x512xf32>
    %299 = arith.subf %298, %4 : vector<8x512xf32>
    %300 = arith.mulf %299, %299 : vector<8x512xf32>
    %301 = arith.addf %294, %300 : vector<8x512xf32>
    %c38 = arith.constant 38 : index
    %302 = arith.index_cast %c0_i32 : i32 to index
    %c0_53 = arith.constant 0 : index
    %303 = vector.load %arg1[%c38, %302, %c0_53] : memref<64x1x512xf32, #tpu.memory_space<vmem>>, vector<1x1x512xf32>
    %304 = vector.shape_cast %303 : vector<1x1x512xf32> to vector<1x512xf32>
    %305 = vector.broadcast %304 : vector<1x512xf32> to vector<8x512xf32>
    %306 = arith.subf %305, %6 : vector<8x512xf32>
    %307 = arith.mulf %306, %306 : vector<8x512xf32>
    %308 = arith.addf %301, %307 : vector<8x512xf32>
    %c39 = arith.constant 39 : index
    %309 = arith.index_cast %c0_i32 : i32 to index
    %c0_54 = arith.constant 0 : index
    %310 = vector.load %arg1[%c39, %309, %c0_54] : memref<64x1x512xf32, #tpu.memory_space<vmem>>, vector<1x1x512xf32>
    %311 = vector.shape_cast %310 : vector<1x1x512xf32> to vector<1x512xf32>
    %312 = vector.broadcast %311 : vector<1x512xf32> to vector<8x512xf32>
    %313 = arith.subf %312, %8 : vector<8x512xf32>
    %314 = arith.mulf %313, %313 : vector<8x512xf32>
    %315 = arith.addf %308, %314 : vector<8x512xf32>
    %316 = vector.broadcast %0 : f32 to vector<8x512xf32>
    %317 = arith.mulf %315, %316 : vector<8x512xf32>
    %318 = math.exp %317 : vector<8x512xf32>
    %319 = arith.addf %288, %318 : vector<8x512xf32>
    %c40 = arith.constant 40 : index
    %320 = arith.index_cast %c0_i32 : i32 to index
    %c0_55 = arith.constant 0 : index
    %321 = vector.load %arg1[%c40, %320, %c0_55] : memref<64x1x512xf32, #tpu.memory_space<vmem>>, vector<1x1x512xf32>
    %322 = vector.shape_cast %321 : vector<1x1x512xf32> to vector<1x512xf32>
    %323 = vector.broadcast %322 : vector<1x512xf32> to vector<8x512xf32>
    %324 = arith.subf %323, %2 : vector<8x512xf32>
    %325 = arith.mulf %324, %324 : vector<8x512xf32>
    %c41 = arith.constant 41 : index
    %326 = arith.index_cast %c0_i32 : i32 to index
    %c0_56 = arith.constant 0 : index
    %327 = vector.load %arg1[%c41, %326, %c0_56] : memref<64x1x512xf32, #tpu.memory_space<vmem>>, vector<1x1x512xf32>
    %328 = vector.shape_cast %327 : vector<1x1x512xf32> to vector<1x512xf32>
    %329 = vector.broadcast %328 : vector<1x512xf32> to vector<8x512xf32>
    %330 = arith.subf %329, %4 : vector<8x512xf32>
    %331 = arith.mulf %330, %330 : vector<8x512xf32>
    %332 = arith.addf %325, %331 : vector<8x512xf32>
    %c42 = arith.constant 42 : index
    %333 = arith.index_cast %c0_i32 : i32 to index
    %c0_57 = arith.constant 0 : index
    %334 = vector.load %arg1[%c42, %333, %c0_57] : memref<64x1x512xf32, #tpu.memory_space<vmem>>, vector<1x1x512xf32>
    %335 = vector.shape_cast %334 : vector<1x1x512xf32> to vector<1x512xf32>
    %336 = vector.broadcast %335 : vector<1x512xf32> to vector<8x512xf32>
    %337 = arith.subf %336, %6 : vector<8x512xf32>
    %338 = arith.mulf %337, %337 : vector<8x512xf32>
    %339 = arith.addf %332, %338 : vector<8x512xf32>
    %c43 = arith.constant 43 : index
    %340 = arith.index_cast %c0_i32 : i32 to index
    %c0_58 = arith.constant 0 : index
    %341 = vector.load %arg1[%c43, %340, %c0_58] : memref<64x1x512xf32, #tpu.memory_space<vmem>>, vector<1x1x512xf32>
    %342 = vector.shape_cast %341 : vector<1x1x512xf32> to vector<1x512xf32>
    %343 = vector.broadcast %342 : vector<1x512xf32> to vector<8x512xf32>
    %344 = arith.subf %343, %8 : vector<8x512xf32>
    %345 = arith.mulf %344, %344 : vector<8x512xf32>
    %346 = arith.addf %339, %345 : vector<8x512xf32>
    %347 = vector.broadcast %0 : f32 to vector<8x512xf32>
    %348 = arith.mulf %346, %347 : vector<8x512xf32>
    %349 = math.exp %348 : vector<8x512xf32>
    %350 = arith.addf %319, %349 : vector<8x512xf32>
    %c44 = arith.constant 44 : index
    %351 = arith.index_cast %c0_i32 : i32 to index
    %c0_59 = arith.constant 0 : index
    %352 = vector.load %arg1[%c44, %351, %c0_59] : memref<64x1x512xf32, #tpu.memory_space<vmem>>, vector<1x1x512xf32>
    %353 = vector.shape_cast %352 : vector<1x1x512xf32> to vector<1x512xf32>
    %354 = vector.broadcast %353 : vector<1x512xf32> to vector<8x512xf32>
    %355 = arith.subf %354, %2 : vector<8x512xf32>
    %356 = arith.mulf %355, %355 : vector<8x512xf32>
    %c45 = arith.constant 45 : index
    %357 = arith.index_cast %c0_i32 : i32 to index
    %c0_60 = arith.constant 0 : index
    %358 = vector.load %arg1[%c45, %357, %c0_60] : memref<64x1x512xf32, #tpu.memory_space<vmem>>, vector<1x1x512xf32>
    %359 = vector.shape_cast %358 : vector<1x1x512xf32> to vector<1x512xf32>
    %360 = vector.broadcast %359 : vector<1x512xf32> to vector<8x512xf32>
    %361 = arith.subf %360, %4 : vector<8x512xf32>
    %362 = arith.mulf %361, %361 : vector<8x512xf32>
    %363 = arith.addf %356, %362 : vector<8x512xf32>
    %c46 = arith.constant 46 : index
    %364 = arith.index_cast %c0_i32 : i32 to index
    %c0_61 = arith.constant 0 : index
    %365 = vector.load %arg1[%c46, %364, %c0_61] : memref<64x1x512xf32, #tpu.memory_space<vmem>>, vector<1x1x512xf32>
    %366 = vector.shape_cast %365 : vector<1x1x512xf32> to vector<1x512xf32>
    %367 = vector.broadcast %366 : vector<1x512xf32> to vector<8x512xf32>
    %368 = arith.subf %367, %6 : vector<8x512xf32>
    %369 = arith.mulf %368, %368 : vector<8x512xf32>
    %370 = arith.addf %363, %369 : vector<8x512xf32>
    %c47 = arith.constant 47 : index
    %371 = arith.index_cast %c0_i32 : i32 to index
    %c0_62 = arith.constant 0 : index
    %372 = vector.load %arg1[%c47, %371, %c0_62] : memref<64x1x512xf32, #tpu.memory_space<vmem>>, vector<1x1x512xf32>
    %373 = vector.shape_cast %372 : vector<1x1x512xf32> to vector<1x512xf32>
    %374 = vector.broadcast %373 : vector<1x512xf32> to vector<8x512xf32>
    %375 = arith.subf %374, %8 : vector<8x512xf32>
    %376 = arith.mulf %375, %375 : vector<8x512xf32>
    %377 = arith.addf %370, %376 : vector<8x512xf32>
    %378 = vector.broadcast %0 : f32 to vector<8x512xf32>
    %379 = arith.mulf %377, %378 : vector<8x512xf32>
    %380 = math.exp %379 : vector<8x512xf32>
    %381 = arith.addf %350, %380 : vector<8x512xf32>
    %c48 = arith.constant 48 : index
    %382 = arith.index_cast %c0_i32 : i32 to index
    %c0_63 = arith.constant 0 : index
    %383 = vector.load %arg1[%c48, %382, %c0_63] : memref<64x1x512xf32, #tpu.memory_space<vmem>>, vector<1x1x512xf32>
    %384 = vector.shape_cast %383 : vector<1x1x512xf32> to vector<1x512xf32>
    %385 = vector.broadcast %384 : vector<1x512xf32> to vector<8x512xf32>
    %386 = arith.subf %385, %2 : vector<8x512xf32>
    %387 = arith.mulf %386, %386 : vector<8x512xf32>
    %c49 = arith.constant 49 : index
    %388 = arith.index_cast %c0_i32 : i32 to index
    %c0_64 = arith.constant 0 : index
    %389 = vector.load %arg1[%c49, %388, %c0_64] : memref<64x1x512xf32, #tpu.memory_space<vmem>>, vector<1x1x512xf32>
    %390 = vector.shape_cast %389 : vector<1x1x512xf32> to vector<1x512xf32>
    %391 = vector.broadcast %390 : vector<1x512xf32> to vector<8x512xf32>
    %392 = arith.subf %391, %4 : vector<8x512xf32>
    %393 = arith.mulf %392, %392 : vector<8x512xf32>
    %394 = arith.addf %387, %393 : vector<8x512xf32>
    %c50 = arith.constant 50 : index
    %395 = arith.index_cast %c0_i32 : i32 to index
    %c0_65 = arith.constant 0 : index
    %396 = vector.load %arg1[%c50, %395, %c0_65] : memref<64x1x512xf32, #tpu.memory_space<vmem>>, vector<1x1x512xf32>
    %397 = vector.shape_cast %396 : vector<1x1x512xf32> to vector<1x512xf32>
    %398 = vector.broadcast %397 : vector<1x512xf32> to vector<8x512xf32>
    %399 = arith.subf %398, %6 : vector<8x512xf32>
    %400 = arith.mulf %399, %399 : vector<8x512xf32>
    %401 = arith.addf %394, %400 : vector<8x512xf32>
    %c51 = arith.constant 51 : index
    %402 = arith.index_cast %c0_i32 : i32 to index
    %c0_66 = arith.constant 0 : index
    %403 = vector.load %arg1[%c51, %402, %c0_66] : memref<64x1x512xf32, #tpu.memory_space<vmem>>, vector<1x1x512xf32>
    %404 = vector.shape_cast %403 : vector<1x1x512xf32> to vector<1x512xf32>
    %405 = vector.broadcast %404 : vector<1x512xf32> to vector<8x512xf32>
    %406 = arith.subf %405, %8 : vector<8x512xf32>
    %407 = arith.mulf %406, %406 : vector<8x512xf32>
    %408 = arith.addf %401, %407 : vector<8x512xf32>
    %409 = vector.broadcast %0 : f32 to vector<8x512xf32>
    %410 = arith.mulf %408, %409 : vector<8x512xf32>
    %411 = math.exp %410 : vector<8x512xf32>
    %412 = arith.addf %381, %411 : vector<8x512xf32>
    %c52 = arith.constant 52 : index
    %413 = arith.index_cast %c0_i32 : i32 to index
    %c0_67 = arith.constant 0 : index
    %414 = vector.load %arg1[%c52, %413, %c0_67] : memref<64x1x512xf32, #tpu.memory_space<vmem>>, vector<1x1x512xf32>
    %415 = vector.shape_cast %414 : vector<1x1x512xf32> to vector<1x512xf32>
    %416 = vector.broadcast %415 : vector<1x512xf32> to vector<8x512xf32>
    %417 = arith.subf %416, %2 : vector<8x512xf32>
    %418 = arith.mulf %417, %417 : vector<8x512xf32>
    %c53 = arith.constant 53 : index
    %419 = arith.index_cast %c0_i32 : i32 to index
    %c0_68 = arith.constant 0 : index
    %420 = vector.load %arg1[%c53, %419, %c0_68] : memref<64x1x512xf32, #tpu.memory_space<vmem>>, vector<1x1x512xf32>
    %421 = vector.shape_cast %420 : vector<1x1x512xf32> to vector<1x512xf32>
    %422 = vector.broadcast %421 : vector<1x512xf32> to vector<8x512xf32>
    %423 = arith.subf %422, %4 : vector<8x512xf32>
    %424 = arith.mulf %423, %423 : vector<8x512xf32>
    %425 = arith.addf %418, %424 : vector<8x512xf32>
    %c54 = arith.constant 54 : index
    %426 = arith.index_cast %c0_i32 : i32 to index
    %c0_69 = arith.constant 0 : index
    %427 = vector.load %arg1[%c54, %426, %c0_69] : memref<64x1x512xf32, #tpu.memory_space<vmem>>, vector<1x1x512xf32>
    %428 = vector.shape_cast %427 : vector<1x1x512xf32> to vector<1x512xf32>
    %429 = vector.broadcast %428 : vector<1x512xf32> to vector<8x512xf32>
    %430 = arith.subf %429, %6 : vector<8x512xf32>
    %431 = arith.mulf %430, %430 : vector<8x512xf32>
    %432 = arith.addf %425, %431 : vector<8x512xf32>
    %c55 = arith.constant 55 : index
    %433 = arith.index_cast %c0_i32 : i32 to index
    %c0_70 = arith.constant 0 : index
    %434 = vector.load %arg1[%c55, %433, %c0_70] : memref<64x1x512xf32, #tpu.memory_space<vmem>>, vector<1x1x512xf32>
    %435 = vector.shape_cast %434 : vector<1x1x512xf32> to vector<1x512xf32>
    %436 = vector.broadcast %435 : vector<1x512xf32> to vector<8x512xf32>
    %437 = arith.subf %436, %8 : vector<8x512xf32>
    %438 = arith.mulf %437, %437 : vector<8x512xf32>
    %439 = arith.addf %432, %438 : vector<8x512xf32>
    %440 = vector.broadcast %0 : f32 to vector<8x512xf32>
    %441 = arith.mulf %439, %440 : vector<8x512xf32>
    %442 = math.exp %441 : vector<8x512xf32>
    %443 = arith.addf %412, %442 : vector<8x512xf32>
    %c56 = arith.constant 56 : index
    %444 = arith.index_cast %c0_i32 : i32 to index
    %c0_71 = arith.constant 0 : index
    %445 = vector.load %arg1[%c56, %444, %c0_71] : memref<64x1x512xf32, #tpu.memory_space<vmem>>, vector<1x1x512xf32>
    %446 = vector.shape_cast %445 : vector<1x1x512xf32> to vector<1x512xf32>
    %447 = vector.broadcast %446 : vector<1x512xf32> to vector<8x512xf32>
    %448 = arith.subf %447, %2 : vector<8x512xf32>
    %449 = arith.mulf %448, %448 : vector<8x512xf32>
    %c57 = arith.constant 57 : index
    %450 = arith.index_cast %c0_i32 : i32 to index
    %c0_72 = arith.constant 0 : index
    %451 = vector.load %arg1[%c57, %450, %c0_72] : memref<64x1x512xf32, #tpu.memory_space<vmem>>, vector<1x1x512xf32>
    %452 = vector.shape_cast %451 : vector<1x1x512xf32> to vector<1x512xf32>
    %453 = vector.broadcast %452 : vector<1x512xf32> to vector<8x512xf32>
    %454 = arith.subf %453, %4 : vector<8x512xf32>
    %455 = arith.mulf %454, %454 : vector<8x512xf32>
    %456 = arith.addf %449, %455 : vector<8x512xf32>
    %c58 = arith.constant 58 : index
    %457 = arith.index_cast %c0_i32 : i32 to index
    %c0_73 = arith.constant 0 : index
    %458 = vector.load %arg1[%c58, %457, %c0_73] : memref<64x1x512xf32, #tpu.memory_space<vmem>>, vector<1x1x512xf32>
    %459 = vector.shape_cast %458 : vector<1x1x512xf32> to vector<1x512xf32>
    %460 = vector.broadcast %459 : vector<1x512xf32> to vector<8x512xf32>
    %461 = arith.subf %460, %6 : vector<8x512xf32>
    %462 = arith.mulf %461, %461 : vector<8x512xf32>
    %463 = arith.addf %456, %462 : vector<8x512xf32>
    %c59 = arith.constant 59 : index
    %464 = arith.index_cast %c0_i32 : i32 to index
    %c0_74 = arith.constant 0 : index
    %465 = vector.load %arg1[%c59, %464, %c0_74] : memref<64x1x512xf32, #tpu.memory_space<vmem>>, vector<1x1x512xf32>
    %466 = vector.shape_cast %465 : vector<1x1x512xf32> to vector<1x512xf32>
    %467 = vector.broadcast %466 : vector<1x512xf32> to vector<8x512xf32>
    %468 = arith.subf %467, %8 : vector<8x512xf32>
    %469 = arith.mulf %468, %468 : vector<8x512xf32>
    %470 = arith.addf %463, %469 : vector<8x512xf32>
    %471 = vector.broadcast %0 : f32 to vector<8x512xf32>
    %472 = arith.mulf %470, %471 : vector<8x512xf32>
    %473 = math.exp %472 : vector<8x512xf32>
    %474 = arith.addf %443, %473 : vector<8x512xf32>
    %c60 = arith.constant 60 : index
    %475 = arith.index_cast %c0_i32 : i32 to index
    %c0_75 = arith.constant 0 : index
    %476 = vector.load %arg1[%c60, %475, %c0_75] : memref<64x1x512xf32, #tpu.memory_space<vmem>>, vector<1x1x512xf32>
    %477 = vector.shape_cast %476 : vector<1x1x512xf32> to vector<1x512xf32>
    %478 = vector.broadcast %477 : vector<1x512xf32> to vector<8x512xf32>
    %479 = arith.subf %478, %2 : vector<8x512xf32>
    %480 = arith.mulf %479, %479 : vector<8x512xf32>
    %c61 = arith.constant 61 : index
    %481 = arith.index_cast %c0_i32 : i32 to index
    %c0_76 = arith.constant 0 : index
    %482 = vector.load %arg1[%c61, %481, %c0_76] : memref<64x1x512xf32, #tpu.memory_space<vmem>>, vector<1x1x512xf32>
    %483 = vector.shape_cast %482 : vector<1x1x512xf32> to vector<1x512xf32>
    %484 = vector.broadcast %483 : vector<1x512xf32> to vector<8x512xf32>
    %485 = arith.subf %484, %4 : vector<8x512xf32>
    %486 = arith.mulf %485, %485 : vector<8x512xf32>
    %487 = arith.addf %480, %486 : vector<8x512xf32>
    %c62 = arith.constant 62 : index
    %488 = arith.index_cast %c0_i32 : i32 to index
    %c0_77 = arith.constant 0 : index
    %489 = vector.load %arg1[%c62, %488, %c0_77] : memref<64x1x512xf32, #tpu.memory_space<vmem>>, vector<1x1x512xf32>
    %490 = vector.shape_cast %489 : vector<1x1x512xf32> to vector<1x512xf32>
    %491 = vector.broadcast %490 : vector<1x512xf32> to vector<8x512xf32>
    %492 = arith.subf %491, %6 : vector<8x512xf32>
    %493 = arith.mulf %492, %492 : vector<8x512xf32>
    %494 = arith.addf %487, %493 : vector<8x512xf32>
    %c63 = arith.constant 63 : index
    %495 = arith.index_cast %c0_i32 : i32 to index
    %c0_78 = arith.constant 0 : index
    %496 = vector.load %arg1[%c63, %495, %c0_78] : memref<64x1x512xf32, #tpu.memory_space<vmem>>, vector<1x1x512xf32>
    %497 = vector.shape_cast %496 : vector<1x1x512xf32> to vector<1x512xf32>
    %498 = vector.broadcast %497 : vector<1x512xf32> to vector<8x512xf32>
    %499 = arith.subf %498, %8 : vector<8x512xf32>
    %500 = arith.mulf %499, %499 : vector<8x512xf32>
    %501 = arith.addf %494, %500 : vector<8x512xf32>
    %502 = vector.broadcast %0 : f32 to vector<8x512xf32>
    %503 = arith.mulf %501, %502 : vector<8x512xf32>
    %504 = math.exp %503 : vector<8x512xf32>
    %505 = arith.addf %474, %504 : vector<8x512xf32>
    %506 = vector.broadcast %cst : f32 to vector<8x512xf32>
    %507 = arith.mulf %505, %506 : vector<8x512xf32>
    %508 = vector.shape_cast %507 : vector<8x512xf32> to vector<8x1x512xf32>
    %c0_79 = arith.constant 0 : index
    %509 = arith.index_cast %c0_i32 : i32 to index
    %c0_80 = arith.constant 0 : index
    %510 = vector.load %arg4[%c0_79, %509, %c0_80] : memref<8x1x512xf32, #tpu.memory_space<vmem>>, vector<8x1x512xf32>
    tpu.vector_store %arg4[%c0_79, %509, %c0_80], %508 {strides = array<i32>} : memref<8x1x512xf32, #tpu.memory_space<vmem>>, vector<8x1x512xf32>,
    %c1_i32 = arith.constant 1 : i32
    return
  }
  func.func @transform_0(%arg0: i32) -> (i32, i32, i32) {
    %c0_i32 = arith.constant 0 : i32
    %c0_i32_0 = arith.constant 0 : i32
    %c0_i32_1 = arith.constant 0 : i32
    return %c0_i32, %arg0, %c0_i32_0 : i32, i32, i32
  }
  func.func @transform_1(%arg0: i32) -> (i32, i32, i32) {
    %c0_i32 = arith.constant 0 : i32
    %c0_i32_0 = arith.constant 0 : i32
    %c0_i32_1 = arith.constant 0 : i32
    %c0_i32_2 = arith.constant 0 : i32
    return %c0_i32, %c0_i32_0, %c0_i32_1 : i32, i32, i32
  }
  func.func @transform_2(%arg0: i32) -> (i32, i32) {
    %c0_i32 = arith.constant 0 : i32
    %c0_i32_0 = arith.constant 0 : i32
    %c0_i32_1 = arith.constant 0 : i32
    return %c0_i32, %c0_i32_0 : i32, i32
  }
  func.func @transform_3(%arg0: i32) -> (i32, i32, i32) {
    %c0_i32 = arith.constant 0 : i32
    %c0_i32_0 = arith.constant 0 : i32
    %c0_i32_1 = arith.constant 0 : i32
    return %c0_i32, %arg0, %c0_i32_0 : i32, i32, i32
  }
}

</mosaic_0001>

<llo_original>
// kernel: tpu_custom_call.1
$region0: #{tpu_custom_call.1}
  #allocation0 [shape = 'u32[]', space=smem, size = 0x4, offset = 0x4, fixed_abs, tag = 'smem constant byte address 0x4 - core index']
  #allocation1 [shape = 'u32[144,128]{1,0:T(1,128)}', space=vmem, size = 0x12000, scoped, tag = 'internal scratch']
  #allocation2 [shape = 'f32[1,1]{1,0:T(1,128)S(6)}', space=smem, size = 0x200, scoped, tag = 'scoped memory for tpu_custom_call.1']
  %s0 = inlined_call_operand.hbm [shape: f32[64,1,512], index: 0, kind: input, shape index: {}]
  %s1 = inlined_call_operand.hbm [shape: f32[4,8,512], index: 1, kind: input, shape index: {}]
  %s2 = inlined_call_operand.<no memory space> [shape: f32[1,1], index: 2, kind: input, shape index: {}]
  %s3 = inlined_call_operand.hbm [shape: f32[8,1,512], index: 3, kind: output, shape index: {}]
  %s4 = sld [smem:[#allocation0]]
  $region30: #{tpu_custom_call.1} parent=0
    _
  %s6 = ssub.s32 1, %s4
  %s7 = scalar_select 0, %s6, %s4
  %8 = sst [smem:[#allocation2]] %s2
  $region1: #{tpu_custom_call.1} parent=0
    #allocation3 [shape = 'u8[131072]{0}', space=vmem, size = 0x20000, scoped, tag = 'input window, operand 0, single buffered']
    #allocation4 [shape = 's32[1]{0}', space=sflag, size = 0x4, scoped, tag = 'scoped memory for tpu_custom_call.1']
    #allocation5 [shape = 's32[1]{0}', space=sflag, size = 0x4, scoped, tag = 'scoped memory for tpu_custom_call.1']
    #allocation6 [shape = 'u8[65536]{0}', space=vmem, size = 0x10000, scoped, tag = 'input window, operand 1, single buffered']
    #allocation7 [shape = 's32[1]{0}', space=sflag, size = 0x4, scoped, tag = 'scoped memory for tpu_custom_call.1']
    #allocation8 [shape = 'u8[16384]{0}', space=vmem, size = 0x4000, scoped, tag = 'output window, operand 0, single buffered']
    %9 = vsyncpa [#allocation4], 0
    %10 = vsyncpa [#allocation7], 0
    %11 = vsyncpa [#allocation5], 0
    // Predicated region
    $region2: #{tpu_custom_call.1} parent=1 // pred_check
      _
    $region3: #{tpu_custom_call.1} parent=1 // pred_check_branch
      %13 = sbr.rel (0) target = $region5
    $region4: #{tpu_custom_call.1} parent=1 // pred_region
      %s15 = ssub.s32 4096, 4096
      %16 = vsyncadd [#allocation4], %s15
      %s17 = sshll.u32 [#allocation3], 4
      %s18 = int_to_ptr.vmem [resolvable:$true] %s17
      %23 = dma.hbm_to_vmem [thread:$0]  %s0, 4096, %s18, [#allocation4], 64, 64, 4
    $region5: #{tpu_custom_call.1} parent=1 // pred_fallthru
      _
    // Predicated region
    $region6: #{tpu_custom_call.1} parent=1 // pred_check
      _
    $region7: #{tpu_custom_call.1} parent=1 // pred_check_branch
      %25 = sbr.rel (0) target = $region9
    $region8: #{tpu_custom_call.1} parent=1 // pred_region
      %s27 = ssub.s32 2048, 2048
      %28 = vsyncadd [#allocation7], %s27
      %s29 = sshll.u32 [#allocation6], 4
      %s30 = int_to_ptr.vmem [resolvable:$true] %s29
      %35 = dma.hbm_to_vmem [thread:$0]  %s1, 2048, %s30, [#allocation7], 512, 512, 32
    $region9: #{tpu_custom_call.1} parent=1 // pred_fallthru
      _
    // Predicated region
    $region10: #{tpu_custom_call.1} parent=1 // pred_check
      _
    $region11: #{tpu_custom_call.1} parent=1 // pred_check_branch
      %37 = sbr.rel (0) target = $region13
    $region12: #{tpu_custom_call.1} parent=1 // pred_region
      _
    $region13: #{tpu_custom_call.1} parent=1 // pred_fallthru
      _
    // Predicated region
    $region14: #{tpu_custom_call.1} parent=1 // pred_check
      _
    $region15: #{tpu_custom_call.1} parent=1 // pred_check_branch
      %39 = sbr.rel (0) target = $region17
    $region16: #{tpu_custom_call.1} parent=1 // pred_region
      %40 = dma.done [#allocation4], 4096
    $region17: #{tpu_custom_call.1} parent=1 // pred_fallthru
      _
    // Predicated region
    $region18: #{tpu_custom_call.1} parent=1 // pred_check
      _
    $region19: #{tpu_custom_call.1} parent=1 // pred_check_branch
      %42 = sbr.rel (0) target = $region21
    $region20: #{tpu_custom_call.1} parent=1 // pred_region
      %43 = dma.done [#allocation7], 2048
    $region21: #{tpu_custom_call.1} parent=1 // pred_fallthru
      _
    %s44 = sld [smem:[#allocation2]]
    %v45 = vld [vmem:[#allocation6] sm:$0xff]
    %v46 = vld [vmem:[#allocation6 + $0x8] sm:$0xff]
    %v47 = vld [vmem:[#allocation6 + $0x10] sm:$0xff]
    %v48 = vld [vmem:[#allocation6 + $0x18] sm:$0xff]
    %s49 = scalar_lea.vmem [#allocation6], 32
    %v50 = vld [vmem:[%s49] sm:$0xff]
    %v51 = vld [vmem:[%s49 + $0x8] sm:$0xff]
    %v52 = vld [vmem:[%s49 + $0x10] sm:$0xff]
    %v53 = vld [vmem:[%s49 + $0x18] sm:$0xff]
    %s54 = scalar_lea.vmem [#allocation6], 64
    %v55 = vld [vmem:[%s54] sm:$0xff]
    %v56 = vld [vmem:[%s54 + $0x8] sm:$0xff]
    %v57 = vld [vmem:[%s54 + $0x10] sm:$0xff]
    %v58 = vld [vmem:[%s54 + $0x18] sm:$0xff]
    %s59 = scalar_lea.vmem [#allocation6], 96
    %v60 = vld [vmem:[%s59] sm:$0xff]
    %v61 = vld [vmem:[%s59 + $0x8] sm:$0xff]
    %v62 = vld [vmem:[%s59 + $0x10] sm:$0xff]
    %v63 = vld [vmem:[%s59 + $0x18] sm:$0xff]
    %v64 = vld [vmem:[#allocation3] sm:$0xf]
    %v66 = vlaneseq
    %v67 = vshrl.u32 %v66, 7
    %v68 = vsub.s32 0, %v67
    %v69 = vrot.slane %v64, %v68
    %v70 = vlaneseq
    %v71 = vshrl.u32 %v70, 7
    %v72 = vsub.s32 1, %v71
    %v73 = vrot.slane %v64, %v72
    %v74 = vlaneseq
    %v75 = vshrl.u32 %v74, 7
    %v76 = vsub.s32 2, %v75
    %v77 = vrot.slane %v64, %v76
    %v78 = vlaneseq
    %v79 = vshrl.u32 %v78, 7
    %v80 = vsub.s32 3, %v79
    %v81 = vrot.slane %v64, %v80
    %v86 = vsub.f32 %v69, %v45
    %v87 = vsub.f32 %v73, %v46
    %v88 = vsub.f32 %v77, %v47
    %v89 = vsub.f32 %v81, %v48
    %v90 = vmul.f32 %v86, %v86
    %v91 = vmul.f32 %v87, %v87
    %v92 = vmul.f32 %v88, %v88
    %v93 = vmul.f32 %v89, %v89
    %s94 = scalar_lea.vmem [#allocation3], 4
    %v95 = vld [vmem:[%s94] sm:$0xf]
    %v97 = vlaneseq
    %v98 = vshrl.u32 %v97, 7
    %v99 = vsub.s32 0, %v98
    %v100 = vrot.slane %v95, %v99
    %v101 = vlaneseq
    %v102 = vshrl.u32 %v101, 7
    %v103 = vsub.s32 1, %v102
    %v104 = vrot.slane %v95, %v103
    %v105 = vlaneseq
    %v106 = vshrl.u32 %v105, 7
    %v107 = vsub.s32 2, %v106
    %v108 = vrot.slane %v95, %v107
    %v109 = vlaneseq
    %v110 = vshrl.u32 %v109, 7
    %v111 = vsub.s32 3, %v110
    %v112 = vrot.slane %v95, %v111
    %v117 = vsub.f32 %v100, %v50
    %v118 = vsub.f32 %v104, %v51
    %v119 = vsub.f32 %v108, %v52
    %v120 = vsub.f32 %v112, %v53
    %v121 = vmul.f32 %v117, %v117
    %v122 = vmul.f32 %v118, %v118
    %v123 = vmul.f32 %v119, %v119
    %v124 = vmul.f32 %v120, %v120
    %v125 = vadd.f32 %v90, %v121
    %v126 = vadd.f32 %v91, %v122
    %v127 = vadd.f32 %v92, %v123
    %v128 = vadd.f32 %v93, %v124
    %s129 = scalar_lea.vmem [#allocation3], 8
    %v130 = vld [vmem:[%s129] sm:$0xf]
    %v132 = vlaneseq
    %v133 = vshrl.u32 %v132, 7
    %v134 = vsub.s32 0, %v133
    %v135 = vrot.slane %v130, %v134
    %v136 = vlaneseq
    %v137 = vshrl.u32 %v136, 7
    %v138 = vsub.s32 1, %v137
    %v139 = vrot.slane %v130, %v138
    %v140 = vlaneseq
    %v141 = vshrl.u32 %v140, 7
    %v142 = vsub.s32 2, %v141
    %v143 = vrot.slane %v130, %v142
    %v144 = vlaneseq
    %v145 = vshrl.u32 %v144, 7
    %v146 = vsub.s32 3, %v145
    %v147 = vrot.slane %v130, %v146
    %v152 = vsub.f32 %v135, %v55
    %v153 = vsub.f32 %v139, %v56
    %v154 = vsub.f32 %v143, %v57
    %v155 = vsub.f32 %v147, %v58
    %v156 = vmul.f32 %v152, %v152
    %v157 = vmul.f32 %v153, %v153
    %v158 = vmul.f32 %v154, %v154
    %v159 = vmul.f32 %v155, %v155
    %v160 = vadd.f32 %v125, %v156
    %v161 = vadd.f32 %v126, %v157
    %v162 = vadd.f32 %v127, %v158
    %v163 = vadd.f32 %v128, %v159
    %s164 = scalar_lea.vmem [#allocation3], 12
    %v165 = vld [vmem:[%s164] sm:$0xf]
    %v167 = vlaneseq
    %v168 = vshrl.u32 %v167, 7
    %v169 = vsub.s32 0, %v168
    %v170 = vrot.slane %v165, %v169
    %v171 = vlaneseq
    %v172 = vshrl.u32 %v171, 7
    %v173 = vsub.s32 1, %v172
    %v174 = vrot.slane %v165, %v173
    %v175 = vlaneseq
    %v176 = vshrl.u32 %v175, 7
    %v177 = vsub.s32 2, %v176
    %v178 = vrot.slane %v165, %v177
    %v179 = vlaneseq
    %v180 = vshrl.u32 %v179, 7
    %v181 = vsub.s32 3, %v180
    %v182 = vrot.slane %v165, %v181
    %v187 = vsub.f32 %v170, %v60
    %v188 = vsub.f32 %v174, %v61
    %v189 = vsub.f32 %v178, %v62
    %v190 = vsub.f32 %v182, %v63
    %v191 = vmul.f32 %v187, %v187
    %v192 = vmul.f32 %v188, %v188
    %v193 = vmul.f32 %v189, %v189
    %v194 = vmul.f32 %v190, %v190
    %v195 = vadd.f32 %v160, %v191
    %v196 = vadd.f32 %v161, %v192
    %v197 = vadd.f32 %v162, %v193
    %v198 = vadd.f32 %v163, %v194
    %v199 = vstv %s44
    %v200 = vmul.f32 %v195, %v199
    %v201 = vmul.f32 %v196, %v199
    %v202 = vmul.f32 %v197, %v199
    %v203 = vmul.f32 %v198, %v199
    %v204 = vmul.f32 %v200, 1.442695
    %v205 = vpow.pop %v204
    %v206 = vmul.f32 %v201, 1.442695
    %v207 = vpow.pop %v206
    %v208 = vmul.f32 %v202, 1.442695
    %v209 = vpow.pop %v208
    %v210 = vmul.f32 %v203, 1.442695
    %v211 = vpow.pop %v210
    %v212 = vadd.f32 %v205, 0.0
    %v213 = vadd.f32 %v207, 0.0
    %v214 = vadd.f32 %v209, 0.0
    %v215 = vadd.f32 %v211, 0.0
    %s216 = scalar_lea.vmem [#allocation3], 16
    %v217 = vld [vmem:[%s216] sm:$0xf]
    %v219 = vlaneseq
    %v220 = vshrl.u32 %v219, 7
    %v221 = vsub.s32 0, %v220
    %v222 = vrot.slane %v217, %v221
    %v223 = vlaneseq
    %v224 = vshrl.u32 %v223, 7
    %v225 = vsub.s32 1, %v224
    %v226 = vrot.slane %v217, %v225
    %v227 = vlaneseq
    %v228 = vshrl.u32 %v227, 7
    %v229 = vsub.s32 2, %v228
    %v230 = vrot.slane %v217, %v229
    %v231 = vlaneseq
    %v232 = vshrl.u32 %v231, 7
    %v233 = vsub.s32 3, %v232
    %v234 = vrot.slane %v217, %v233
    %v239 = vsub.f32 %v222, %v45
    %v240 = vsub.f32 %v226, %v46
    %v241 = vsub.f32 %v230, %v47
    %v242 = vsub.f32 %v234, %v48
    %v243 = vmul.f32 %v239, %v239
    %v244 = vmul.f32 %v240, %v240
    %v245 = vmul.f32 %v241, %v241
    %v246 = vmul.f32 %v242, %v242
    %s247 = scalar_lea.vmem [#allocation3], 20
    %v248 = vld [vmem:[%s247] sm:$0xf]
    %v250 = vlaneseq
    %v251 = vshrl.u32 %v250, 7
    %v252 = vsub.s32 0, %v251
    %v253 = vrot.slane %v248, %v252
    %v254 = vlaneseq
    %v255 = vshrl.u32 %v254, 7
    %v256 = vsub.s32 1, %v255
    %v257 = vrot.slane %v248, %v256
    %v258 = vlaneseq
    %v259 = vshrl.u32 %v258, 7
    %v260 = vsub.s32 2, %v259
    %v261 = vrot.slane %v248, %v260
    %v262 = vlaneseq
    %v263 = vshrl.u32 %v262, 7
    %v264 = vsub.s32 3, %v263
    %v265 = vrot.slane %v248, %v264
    %v270 = vsub.f32 %v253, %v50
    %v271 = vsub.f32 %v257, %v51
    %v272 = vsub.f32 %v261, %v52
    %v273 = vsub.f32 %v265, %v53
    %v274 = vmul.f32 %v270, %v270
    %v275 = vmul.f32 %v271, %v271
    %v276 = vmul.f32 %v272, %v272
    %v277 = vmul.f32 %v273, %v273
    %v278 = vadd.f32 %v243, %v274
    %v279 = vadd.f32 %v244, %v275
    %v280 = vadd.f32 %v245, %v276
    %v281 = vadd.f32 %v246, %v277
    %s282 = scalar_lea.vmem [#allocation3], 24
    %v283 = vld [vmem:[%s282] sm:$0xf]
    %v285 = vlaneseq
    %v286 = vshrl.u32 %v285, 7
    %v287 = vsub.s32 0, %v286
    %v288 = vrot.slane %v283, %v287
    %v289 = vlaneseq
    %v290 = vshrl.u32 %v289, 7
    %v291 = vsub.s32 1, %v290
    %v292 = vrot.slane %v283, %v291
    %v293 = vlaneseq
    %v294 = vshrl.u32 %v293, 7
    %v295 = vsub.s32 2, %v294
    %v296 = vrot.slane %v283, %v295
    %v297 = vlaneseq
    %v298 = vshrl.u32 %v297, 7
    %v299 = vsub.s32 3, %v298
    %v300 = vrot.slane %v283, %v299
    %v305 = vsub.f32 %v288, %v55
    %v306 = vsub.f32 %v292, %v56
    %v307 = vsub.f32 %v296, %v57
    %v308 = vsub.f32 %v300, %v58
    %v309 = vmul.f32 %v305, %v305
    %v310 = vmul.f32 %v306, %v306
    %v311 = vmul.f32 %v307, %v307
    %v312 = vmul.f32 %v308, %v308
    %v313 = vadd.f32 %v278, %v309
    %v314 = vadd.f32 %v279, %v310
    %v315 = vadd.f32 %v280, %v311
    %v316 = vadd.f32 %v281, %v312
    %s317 = scalar_lea.vmem [#allocation3], 28
    %v318 = vld [vmem:[%s317] sm:$0xf]
    %v320 = vlaneseq
    %v321 = vshrl.u32 %v320, 7
    %v322 = vsub.s32 0, %v321
    %v323 = vrot.slane %v318, %v322
    %v324 = vlaneseq
    %v325 = vshrl.u32 %v324, 7
    %v326 = vsub.s32 1, %v325
    %v327 = vrot.slane %v318, %v326
    %v328 = vlaneseq
    %v329 = vshrl.u32 %v328, 7
    %v330 = vsub.s32 2, %v329
    %v331 = vrot.slane %v318, %v330
    %v332 = vlaneseq
    %v333 = vshrl.u32 %v332, 7
    %v334 = vsub.s32 3, %v333
    %v335 = vrot.slane %v318, %v334
    %v340 = vsub.f32 %v323, %v60
    %v341 = vsub.f32 %v327, %v61
    %v342 = vsub.f32 %v331, %v62
    %v343 = vsub.f32 %v335, %v63
    %v344 = vmul.f32 %v340, %v340
    %v345 = vmul.f32 %v341, %v341
    %v346 = vmul.f32 %v342, %v342
    %v347 = vmul.f32 %v343, %v343
    %v348 = vadd.f32 %v313, %v344
    %v349 = vadd.f32 %v314, %v345
    %v350 = vadd.f32 %v315, %v346
    %v351 = vadd.f32 %v316, %v347
    %v352 = vmul.f32 %v348, %v199
    %v353 = vmul.f32 %v349, %v199
    %v354 = vmul.f32 %v350, %v199
    %v355 = vmul.f32 %v351, %v199
    %v356 = vmul.f32 %v352, 1.442695
    %v357 = vpow.pop %v356
    %v358 = vmul.f32 %v353, 1.442695
    %v359 = vpow.pop %v358
    %v360 = vmul.f32 %v354, 1.442695
    %v361 = vpow.pop %v360
    %v362 = vmul.f32 %v355, 1.442695
    %v363 = vpow.pop %v362
    %v364 = vadd.f32 %v212, %v357
    %v365 = vadd.f32 %v213, %v359
    %v366 = vadd.f32 %v214, %v361
    %v367 = vadd.f32 %v215, %v363
    %s368 = scalar_lea.vmem [#allocation3], 32
    %v369 = vld [vmem:[%s368] sm:$0xf]
    %v371 = vlaneseq
    %v372 = vshrl.u32 %v371, 7
    %v373 = vsub.s32 0, %v372
    %v374 = vrot.slane %v369, %v373
    %v375 = vlaneseq
    %v376 = vshrl.u32 %v375, 7
    %v377 = vsub.s32 1, %v376
    %v378 = vrot.slane %v369, %v377
    %v379 = vlaneseq
    %v380 = vshrl.u32 %v379, 7
    %v381 = vsub.s32 2, %v380
    %v382 = vrot.slane %v369, %v381
    %v383 = vlaneseq
    %v384 = vshrl.u32 %v383, 7
    %v385 = vsub.s32 3, %v384
    %v386 = vrot.slane %v369, %v385
    %v391 = vsub.f32 %v374, %v45
    %v392 = vsub.f32 %v378, %v46
    %v393 = vsub.f32 %v382, %v47
    %v394 = vsub.f32 %v386, %v48
    %v395 = vmul.f32 %v391, %v391
    %v396 = vmul.f32 %v392, %v392
    %v397 = vmul.f32 %v393, %v393
    %v398 = vmul.f32 %v394, %v394
    %s399 = scalar_lea.vmem [#allocation3], 36
    %v400 = vld [vmem:[%s399] sm:$0xf]
    %v402 = vlaneseq
    %v403 = vshrl.u32 %v402, 7
    %v404 = vsub.s32 0, %v403
    %v405 = vrot.slane %v400, %v404
    %v406 = vlaneseq
    %v407 = vshrl.u32 %v406, 7
    %v408 = vsub.s32 1, %v407
    %v409 = vrot.slane %v400, %v408
    %v410 = vlaneseq
    %v411 = vshrl.u32 %v410, 7
    %v412 = vsub.s32 2, %v411
    %v413 = vrot.slane %v400, %v412
    %v414 = vlaneseq
    %v415 = vshrl.u32 %v414, 7
    %v416 = vsub.s32 3, %v415
    %v417 = vrot.slane %v400, %v416
    %v422 = vsub.f32 %v405, %v50
    %v423 = vsub.f32 %v409, %v51
    %v424 = vsub.f32 %v413, %v52
    %v425 = vsub.f32 %v417, %v53
    %v426 = vmul.f32 %v422, %v422
    %v427 = vmul.f32 %v423, %v423
    %v428 = vmul.f32 %v424, %v424
    %v429 = vmul.f32 %v425, %v425
    %v430 = vadd.f32 %v395, %v426
    %v431 = vadd.f32 %v396, %v427
    %v432 = vadd.f32 %v397, %v428
    %v433 = vadd.f32 %v398, %v429
    %s434 = scalar_lea.vmem [#allocation3], 40
    %v435 = vld [vmem:[%s434] sm:$0xf]
    %v437 = vlaneseq
    %v438 = vshrl.u32 %v437, 7
    %v439 = vsub.s32 0, %v438
    %v440 = vrot.slane %v435, %v439
    %v441 = vlaneseq
    %v442 = vshrl.u32 %v441, 7
    %v443 = vsub.s32 1, %v442
    %v444 = vrot.slane %v435, %v443
    %v445 = vlaneseq
    %v446 = vshrl.u32 %v445, 7
    %v447 = vsub.s32 2, %v446
    %v448 = vrot.slane %v435, %v447
    %v449 = vlaneseq
    %v450 = vshrl.u32 %v449, 7
    %v451 = vsub.s32 3, %v450
    %v452 = vrot.slane %v435, %v451
    %v457 = vsub.f32 %v440, %v55
    %v458 = vsub.f32 %v444, %v56
    %v459 = vsub.f32 %v448, %v57
    %v460 = vsub.f32 %v452, %v58
    %v461 = vmul.f32 %v457, %v457
    %v462 = vmul.f32 %v458, %v458
    %v463 = vmul.f32 %v459, %v459
    %v464 = vmul.f32 %v460, %v460
    %v465 = vadd.f32 %v430, %v461
    %v466 = vadd.f32 %v431, %v462
    %v467 = vadd.f32 %v432, %v463
    %v468 = vadd.f32 %v433, %v464
    %s469 = scalar_lea.vmem [#allocation3], 44
    %v470 = vld [vmem:[%s469] sm:$0xf]
    %v472 = vlaneseq
    %v473 = vshrl.u32 %v472, 7
    %v474 = vsub.s32 0, %v473
    %v475 = vrot.slane %v470, %v474
    %v476 = vlaneseq
    %v477 = vshrl.u32 %v476, 7
    %v478 = vsub.s32 1, %v477
    %v479 = vrot.slane %v470, %v478
    %v480 = vlaneseq
    %v481 = vshrl.u32 %v480, 7
    %v482 = vsub.s32 2, %v481
    %v483 = vrot.slane %v470, %v482
    %v484 = vlaneseq
    %v485 = vshrl.u32 %v484, 7
    %v486 = vsub.s32 3, %v485
    %v487 = vrot.slane %v470, %v486
    %v492 = vsub.f32 %v475, %v60
    %v493 = vsub.f32 %v479, %v61
    %v494 = vsub.f32 %v483, %v62
    %v495 = vsub.f32 %v487, %v63
    %v496 = vmul.f32 %v492, %v492
    %v497 = vmul.f32 %v493, %v493
    %v498 = vmul.f32 %v494, %v494
    %v499 = vmul.f32 %v495, %v495
    %v500 = vadd.f32 %v465, %v496
    %v501 = vadd.f32 %v466, %v497
    %v502 = vadd.f32 %v467, %v498
    %v503 = vadd.f32 %v468, %v499
    %v504 = vmul.f32 %v500, %v199
    %v505 = vmul.f32 %v501, %v199
    %v506 = vmul.f32 %v502, %v199
    %v507 = vmul.f32 %v503, %v199
    %v508 = vmul.f32 %v504, 1.442695
    %v509 = vpow.pop %v508
    %v510 = vmul.f32 %v505, 1.442695
    %v511 = vpow.pop %v510
    %v512 = vmul.f32 %v506, 1.442695
    %v513 = vpow.pop %v512
    %v514 = vmul.f32 %v507, 1.442695
    %v515 = vpow.pop %v514
    %v516 = vadd.f32 %v364, %v509
    %v517 = vadd.f32 %v365, %v511
    %v518 = vadd.f32 %v366, %v513
    %v519 = vadd.f32 %v367, %v515
    %s520 = scalar_lea.vmem [#allocation3], 48
    %v521 = vld [vmem:[%s520] sm:$0xf]
    %v523 = vlaneseq
    %v524 = vshrl.u32 %v523, 7
    %v525 = vsub.s32 0, %v524
    %v526 = vrot.slane %v521, %v525
    %v527 = vlaneseq
    %v528 = vshrl.u32 %v527, 7
    %v529 = vsub.s32 1, %v528
    %v530 = vrot.slane %v521, %v529
    %v531 = vlaneseq
    %v532 = vshrl.u32 %v531, 7
    %v533 = vsub.s32 2, %v532
    %v534 = vrot.slane %v521, %v533
    %v535 = vlaneseq
    %v536 = vshrl.u32 %v535, 7
    %v537 = vsub.s32 3, %v536
    %v538 = vrot.slane %v521, %v537
    %v543 = vsub.f32 %v526, %v45
    %v544 = vsub.f32 %v530, %v46
    %v545 = vsub.f32 %v534, %v47
    %v546 = vsub.f32 %v538, %v48
    %v547 = vmul.f32 %v543, %v543
    %v548 = vmul.f32 %v544, %v544
    %v549 = vmul.f32 %v545, %v545
    %v550 = vmul.f32 %v546, %v546
    %s551 = scalar_lea.vmem [#allocation3], 52
    %v552 = vld [vmem:[%s551] sm:$0xf]
    %v554 = vlaneseq
    %v555 = vshrl.u32 %v554, 7
    %v556 = vsub.s32 0, %v555
    %v557 = vrot.slane %v552, %v556
    %v558 = vlaneseq
    %v559 = vshrl.u32 %v558, 7
    %v560 = vsub.s32 1, %v559
    %v561 = vrot.slane %v552, %v560
    %v562 = vlaneseq
    %v563 = vshrl.u32 %v562, 7
    %v564 = vsub.s32 2, %v563
    %v565 = vrot.slane %v552, %v564
    %v566 = vlaneseq
    %v567 = vshrl.u32 %v566, 7
    %v568 = vsub.s32 3, %v567
    %v569 = vrot.slane %v552, %v568
    %v574 = vsub.f32 %v557, %v50
    %v575 = vsub.f32 %v561, %v51
    %v576 = vsub.f32 %v565, %v52
    %v577 = vsub.f32 %v569, %v53
    %v578 = vmul.f32 %v574, %v574
    %v579 = vmul.f32 %v575, %v575
    %v580 = vmul.f32 %v576, %v576
    %v581 = vmul.f32 %v577, %v577
    %v582 = vadd.f32 %v547, %v578
    %v583 = vadd.f32 %v548, %v579
    %v584 = vadd.f32 %v549, %v580
    %v585 = vadd.f32 %v550, %v581
    %s586 = scalar_lea.vmem [#allocation3], 56
    %v587 = vld [vmem:[%s586] sm:$0xf]
    %v589 = vlaneseq
    %v590 = vshrl.u32 %v589, 7
    %v591 = vsub.s32 0, %v590
    %v592 = vrot.slane %v587, %v591
    %v593 = vlaneseq
    %v594 = vshrl.u32 %v593, 7
    %v595 = vsub.s32 1, %v594
    %v596 = vrot.slane %v587, %v595
    %v597 = vlaneseq
    %v598 = vshrl.u32 %v597, 7
    %v599 = vsub.s32 2, %v598
    %v600 = vrot.slane %v587, %v599
    %v601 = vlaneseq
    %v602 = vshrl.u32 %v601, 7
    %v603 = vsub.s32 3, %v602
    %v604 = vrot.slane %v587, %v603
    %v609 = vsub.f32 %v592, %v55
    %v610 = vsub.f32 %v596, %v56
    %v611 = vsub.f32 %v600, %v57
    %v612 = vsub.f32 %v604, %v58
    %v613 = vmul.f32 %v609, %v609
    %v614 = vmul.f32 %v610, %v610
    %v615 = vmul.f32 %v611, %v611
    %v616 = vmul.f32 %v612, %v612
    %v617 = vadd.f32 %v582, %v613
    %v618 = vadd.f32 %v583, %v614
    %v619 = vadd.f32 %v584, %v615
    %v620 = vadd.f32 %v585, %v616
    %s621 = scalar_lea.vmem [#allocation3], 60
    %v622 = vld [vmem:[%s621] sm:$0xf]
    %v624 = vlaneseq
    %v625 = vshrl.u32 %v624, 7
    %v626 = vsub.s32 0, %v625
    %v627 = vrot.slane %v622, %v626
    %v628 = vlaneseq
    %v629 = vshrl.u32 %v628, 7
    %v630 = vsub.s32 1, %v629
    %v631 = vrot.slane %v622, %v630
    %v632 = vlaneseq
    %v633 = vshrl.u32 %v632, 7
    %v634 = vsub.s32 2, %v633
    %v635 = vrot.slane %v622, %v634
    %v636 = vlaneseq
    %v637 = vshrl.u32 %v636, 7
    %v638 = vsub.s32 3, %v637
    %v639 = vrot.slane %v622, %v638
    %v644 = vsub.f32 %v627, %v60
    %v645 = vsub.f32 %v631, %v61
    %v646 = vsub.f32 %v635, %v62
    %v647 = vsub.f32 %v639, %v63
    %v648 = vmul.f32 %v644, %v644
    %v649 = vmul.f32 %v645, %v645
    %v650 = vmul.f32 %v646, %v646
    %v651 = vmul.f32 %v647, %v647
    %v652 = vadd.f32 %v617, %v648
    %v653 = vadd.f32 %v618, %v649
    %v654 = vadd.f32 %v619, %v650
    %v655 = vadd.f32 %v620, %v651
    %v656 = vmul.f32 %v652, %v199
    %v657 = vmul.f32 %v653, %v199
    %v658 = vmul.f32 %v654, %v199
    %v659 = vmul.f32 %v655, %v199
    %v660 = vmul.f32 %v656, 1.442695
    %v661 = vpow.pop %v660
    %v662 = vmul.f32 %v657, 1.442695
    %v663 = vpow.pop %v662
    %v664 = vmul.f32 %v658, 1.442695
    %v665 = vpow.pop %v664
    %v666 = vmul.f32 %v659, 1.442695
    %v667 = vpow.pop %v666
    %v668 = vadd.f32 %v516, %v661
    %v669 = vadd.f32 %v517, %v663
    %v670 = vadd.f32 %v518, %v665
    %v671 = vadd.f32 %v519, %v667
    %s672 = scalar_lea.vmem [#allocation3], 64
    %v673 = vld [vmem:[%s672] sm:$0xf]
    %v675 = vlaneseq
    %v676 = vshrl.u32 %v675, 7
    %v677 = vsub.s32 0, %v676
    %v678 = vrot.slane %v673, %v677
    %v679 = vlaneseq
    %v680 = vshrl.u32 %v679, 7
    %v681 = vsub.s32 1, %v680
    %v682 = vrot.slane %v673, %v681
    %v683 = vlaneseq
    %v684 = vshrl.u32 %v683, 7
    %v685 = vsub.s32 2, %v684
    %v686 = vrot.slane %v673, %v685
    %v687 = vlaneseq
    %v688 = vshrl.u32 %v687, 7
    %v689 = vsub.s32 3, %v688
    %v690 = vrot.slane %v673, %v689
    %v695 = vsub.f32 %v678, %v45
    %v696 = vsub.f32 %v682, %v46
    %v697 = vsub.f32 %v686, %v47
    %v698 = vsub.f32 %v690, %v48
    %v699 = vmul.f32 %v695, %v695
    %v700 = vmul.f32 %v696, %v696
    %v701 = vmul.f32 %v697, %v697
    %v702 = vmul.f32 %v698, %v698
    %s703 = scalar_lea.vmem [#allocation3], 68
    %v704 = vld [vmem:[%s703] sm:$0xf]
    %v706 = vlaneseq
    %v707 = vshrl.u32 %v706, 7
    %v708 = vsub.s32 0, %v707
    %v709 = vrot.slane %v704, %v708
    %v710 = vlaneseq
    %v711 = vshrl.u32 %v710, 7
    %v712 = vsub.s32 1, %v711
    %v713 = vrot.slane %v704, %v712
    %v714 = vlaneseq
    %v715 = vshrl.u32 %v714, 7
    %v716 = vsub.s32 2, %v715
    %v717 = vrot.slane %v704, %v716
    %v718 = vlaneseq
    %v719 = vshrl.u32 %v718, 7
    %v720 = vsub.s32 3, %v719
    %v721 = vrot.slane %v704, %v720
    %v726 = vsub.f32 %v709, %v50
    %v727 = vsub.f32 %v713, %v51
    %v728 = vsub.f32 %v717, %v52
    %v729 = vsub.f32 %v721, %v53
    %v730 = vmul.f32 %v726, %v726
    %v731 = vmul.f32 %v727, %v727
    %v732 = vmul.f32 %v728, %v728
    %v733 = vmul.f32 %v729, %v729
    %v734 = vadd.f32 %v699, %v730
    %v735 = vadd.f32 %v700, %v731
    %v736 = vadd.f32 %v701, %v732
    %v737 = vadd.f32 %v702, %v733
    %s738 = scalar_lea.vmem [#allocation3], 72
    %v739 = vld [vmem:[%s738] sm:$0xf]
    %v741 = vlaneseq
    %v742 = vshrl.u32 %v741, 7
    %v743 = vsub.s32 0, %v742
    %v744 = vrot.slane %v739, %v743
    %v745 = vlaneseq
    %v746 = vshrl.u32 %v745, 7
    %v747 = vsub.s32 1, %v746
    %v748 = vrot.slane %v739, %v747
    %v749 = vlaneseq
    %v750 = vshrl.u32 %v749, 7
    %v751 = vsub.s32 2, %v750
    %v752 = vrot.slane %v739, %v751
    %v753 = vlaneseq
    %v754 = vshrl.u32 %v753, 7
    %v755 = vsub.s32 3, %v754
    %v756 = vrot.slane %v739, %v755
    %v761 = vsub.f32 %v744, %v55
    %v762 = vsub.f32 %v748, %v56
    %v763 = vsub.f32 %v752, %v57
    %v764 = vsub.f32 %v756, %v58
    %v765 = vmul.f32 %v761, %v761
    %v766 = vmul.f32 %v762, %v762
    %v767 = vmul.f32 %v763, %v763
    %v768 = vmul.f32 %v764, %v764
    %v769 = vadd.f32 %v734, %v765
    %v770 = vadd.f32 %v735, %v766
    %v771 = vadd.f32 %v736, %v767
    %v772 = vadd.f32 %v737, %v768
    %s773 = scalar_lea.vmem [#allocation3], 76
    %v774 = vld [vmem:[%s773] sm:$0xf]
    %v776 = vlaneseq
    %v777 = vshrl.u32 %v776, 7
    %v778 = vsub.s32 0, %v777
    %v779 = vrot.slane %v774, %v778
    %v780 = vlaneseq
    %v781 = vshrl.u32 %v780, 7
    %v782 = vsub.s32 1, %v781
    %v783 = vrot.slane %v774, %v782
    %v784 = vlaneseq
    %v785 = vshrl.u32 %v784, 7
    %v786 = vsub.s32 2, %v785
    %v787 = vrot.slane %v774, %v786
    %v788 = vlaneseq
    %v789 = vshrl.u32 %v788, 7
    %v790 = vsub.s32 3, %v789
    %v791 = vrot.slane %v774, %v790
    %v796 = vsub.f32 %v779, %v60
    %v797 = vsub.f32 %v783, %v61
    %v798 = vsub.f32 %v787, %v62
    %v799 = vsub.f32 %v791, %v63
    %v800 = vmul.f32 %v796, %v796
    %v801 = vmul.f32 %v797, %v797
    %v802 = vmul.f32 %v798, %v798
    %v803 = vmul.f32 %v799, %v799
    %v804 = vadd.f32 %v769, %v800
    %v805 = vadd.f32 %v770, %v801
    %v806 = vadd.f32 %v771, %v802
    %v807 = vadd.f32 %v772, %v803
    %v808 = vmul.f32 %v804, %v199
    %v809 = vmul.f32 %v805, %v199
    %v810 = vmul.f32 %v806, %v199
    %v811 = vmul.f32 %v807, %v199
    %v812 = vmul.f32 %v808, 1.442695
    %v813 = vpow.pop %v812
    %v814 = vmul.f32 %v809, 1.442695
    %v815 = vpow.pop %v814
    %v816 = vmul.f32 %v810, 1.442695
    %v817 = vpow.pop %v816
    %v818 = vmul.f32 %v811, 1.442695
    %v819 = vpow.pop %v818
    %v820 = vadd.f32 %v668, %v813
    %v821 = vadd.f32 %v669, %v815
    %v822 = vadd.f32 %v670, %v817
    %v823 = vadd.f32 %v671, %v819
    %s824 = scalar_lea.vmem [#allocation3], 80
    %v825 = vld [vmem:[%s824] sm:$0xf]
    %v827 = vlaneseq
    %v828 = vshrl.u32 %v827, 7
    %v829 = vsub.s32 0, %v828
    %v830 = vrot.slane %v825, %v829
    %v831 = vlaneseq
    %v832 = vshrl.u32 %v831, 7
    %v833 = vsub.s32 1, %v832
    %v834 = vrot.slane %v825, %v833
    %v835 = vlaneseq
    %v836 = vshrl.u32 %v835, 7
    %v837 = vsub.s32 2, %v836
    %v838 = vrot.slane %v825, %v837
    %v839 = vlaneseq
    %v840 = vshrl.u32 %v839, 7
    %v841 = vsub.s32 3, %v840
    %v842 = vrot.slane %v825, %v841
    %v847 = vsub.f32 %v830, %v45
    %v848 = vsub.f32 %v834, %v46
    %v849 = vsub.f32 %v838, %v47
    %v850 = vsub.f32 %v842, %v48
    %v851 = vmul.f32 %v847, %v847
    %v852 = vmul.f32 %v848, %v848
    %v853 = vmul.f32 %v849, %v849
    %v854 = vmul.f32 %v850, %v850
    %s855 = scalar_lea.vmem [#allocation3], 84
    %v856 = vld [vmem:[%s855] sm:$0xf]
    %v858 = vlaneseq
    %v859 = vshrl.u32 %v858, 7
    %v860 = vsub.s32 0, %v859
    %v861 = vrot.slane %v856, %v860
    %v862 = vlaneseq
    %v863 = vshrl.u32 %v862, 7
    %v864 = vsub.s32 1, %v863
    %v865 = vrot.slane %v856, %v864
    %v866 = vlaneseq
    %v867 = vshrl.u32 %v866, 7
    %v868 = vsub.s32 2, %v867
    %v869 = vrot.slane %v856, %v868
    %v870 = vlaneseq
    %v871 = vshrl.u32 %v870, 7
    %v872 = vsub.s32 3, %v871
    %v873 = vrot.slane %v856, %v872
    %v878 = vsub.f32 %v861, %v50
    %v879 = vsub.f32 %v865, %v51
    %v880 = vsub.f32 %v869, %v52
    %v881 = vsub.f32 %v873, %v53
    %v882 = vmul.f32 %v878, %v878
    %v883 = vmul.f32 %v879, %v879
    %v884 = vmul.f32 %v880, %v880
    %v885 = vmul.f32 %v881, %v881
    %v886 = vadd.f32 %v851, %v882
    %v887 = vadd.f32 %v852, %v883
    %v888 = vadd.f32 %v853, %v884
    %v889 = vadd.f32 %v854, %v885
    %s890 = scalar_lea.vmem [#allocation3], 88
    %v891 = vld [vmem:[%s890] sm:$0xf]
    %v893 = vlaneseq
    %v894 = vshrl.u32 %v893, 7
    %v895 = vsub.s32 0, %v894
    %v896 = vrot.slane %v891, %v895
    %v897 = vlaneseq
    %v898 = vshrl.u32 %v897, 7
    %v899 = vsub.s32 1, %v898
    %v900 = vrot.slane %v891, %v899
    %v901 = vlaneseq
    %v902 = vshrl.u32 %v901, 7
    %v903 = vsub.s32 2, %v902
    %v904 = vrot.slane %v891, %v903
    %v905 = vlaneseq
    %v906 = vshrl.u32 %v905, 7
    %v907 = vsub.s32 3, %v906
    %v908 = vrot.slane %v891, %v907
    %v913 = vsub.f32 %v896, %v55
    %v914 = vsub.f32 %v900, %v56
    %v915 = vsub.f32 %v904, %v57
    %v916 = vsub.f32 %v908, %v58
    %v917 = vmul.f32 %v913, %v913
    %v918 = vmul.f32 %v914, %v914
    %v919 = vmul.f32 %v915, %v915
    %v920 = vmul.f32 %v916, %v916
    %v921 = vadd.f32 %v886, %v917
    %v922 = vadd.f32 %v887, %v918
    %v923 = vadd.f32 %v888, %v919
    %v924 = vadd.f32 %v889, %v920
    %s925 = scalar_lea.vmem [#allocation3], 92
    %v926 = vld [vmem:[%s925] sm:$0xf]
    %v928 = vlaneseq
    %v929 = vshrl.u32 %v928, 7
    %v930 = vsub.s32 0, %v929
    %v931 = vrot.slane %v926, %v930
    %v932 = vlaneseq
    %v933 = vshrl.u32 %v932, 7
    %v934 = vsub.s32 1, %v933
    %v935 = vrot.slane %v926, %v934
    %v936 = vlaneseq
    %v937 = vshrl.u32 %v936, 7
    %v938 = vsub.s32 2, %v937
    %v939 = vrot.slane %v926, %v938
    %v940 = vlaneseq
    %v941 = vshrl.u32 %v940, 7
    %v942 = vsub.s32 3, %v941
    %v943 = vrot.slane %v926, %v942
    %v948 = vsub.f32 %v931, %v60
    %v949 = vsub.f32 %v935, %v61
    %v950 = vsub.f32 %v939, %v62
    %v951 = vsub.f32 %v943, %v63
    %v952 = vmul.f32 %v948, %v948
    %v953 = vmul.f32 %v949, %v949
    %v954 = vmul.f32 %v950, %v950
    %v955 = vmul.f32 %v951, %v951
    %v956 = vadd.f32 %v921, %v952
    %v957 = vadd.f32 %v922, %v953
    %v958 = vadd.f32 %v923, %v954
    %v959 = vadd.f32 %v924, %v955
    %v960 = vmul.f32 %v956, %v199
    %v961 = vmul.f32 %v957, %v199
    %v962 = vmul.f32 %v958, %v199
    %v963 = vmul.f32 %v959, %v199
    %v964 = vmul.f32 %v960, 1.442695
    %v965 = vpow.pop %v964
    %v966 = vmul.f32 %v961, 1.442695
    %v967 = vpow.pop %v966
    %v968 = vmul.f32 %v962, 1.442695
    %v969 = vpow.pop %v968
    %v970 = vmul.f32 %v963, 1.442695
    %v971 = vpow.pop %v970
    %v972 = vadd.f32 %v820, %v965
    %v973 = vadd.f32 %v821, %v967
    %v974 = vadd.f32 %v822, %v969
    %v975 = vadd.f32 %v823, %v971
    %s976 = scalar_lea.vmem [#allocation3], 96
    %v977 = vld [vmem:[%s976] sm:$0xf]
    %v979 = vlaneseq
    %v980 = vshrl.u32 %v979, 7
    %v981 = vsub.s32 0, %v980
    %v982 = vrot.slane %v977, %v981
    %v983 = vlaneseq
    %v984 = vshrl.u32 %v983, 7
    %v985 = vsub.s32 1, %v984
    %v986 = vrot.slane %v977, %v985
    %v987 = vlaneseq
    %v988 = vshrl.u32 %v987, 7
    %v989 = vsub.s32 2, %v988
    %v990 = vrot.slane %v977, %v989
    %v991 = vlaneseq
    %v992 = vshrl.u32 %v991, 7
    %v993 = vsub.s32 3, %v992
    %v994 = vrot.slane %v977, %v993
    %v999 = vsub.f32 %v982, %v45
    %v1000 = vsub.f32 %v986, %v46
    %v1001 = vsub.f32 %v990, %v47
    %v1002 = vsub.f32 %v994, %v48
    %v1003 = vmul.f32 %v999, %v999
    %v1004 = vmul.f32 %v1000, %v1000
    %v1005 = vmul.f32 %v1001, %v1001
    %v1006 = vmul.f32 %v1002, %v1002
    %s1007 = scalar_lea.vmem [#allocation3], 100
    %v1008 = vld [vmem:[%s1007] sm:$0xf]
    %v1010 = vlaneseq
    %v1011 = vshrl.u32 %v1010, 7
    %v1012 = vsub.s32 0, %v1011
    %v1013 = vrot.slane %v1008, %v1012
    %v1014 = vlaneseq
    %v1015 = vshrl.u32 %v1014, 7
    %v1016 = vsub.s32 1, %v1015
    %v1017 = vrot.slane %v1008, %v1016
    %v1018 = vlaneseq
    %v1019 = vshrl.u32 %v1018, 7
    %v1020 = vsub.s32 2, %v1019
    %v1021 = vrot.slane %v1008, %v1020
    %v1022 = vlaneseq
    %v1023 = vshrl.u32 %v1022, 7
    %v1024 = vsub.s32 3, %v1023
    %v1025 = vrot.slane %v1008, %v1024
    %v1030 = vsub.f32 %v1013, %v50
    %v1031 = vsub.f32 %v1017, %v51
    %v1032 = vsub.f32 %v1021, %v52
    %v1033 = vsub.f32 %v1025, %v53
    %v1034 = vmul.f32 %v1030, %v1030
    %v1035 = vmul.f32 %v1031, %v1031
    %v1036 = vmul.f32 %v1032, %v1032
    %v1037 = vmul.f32 %v1033, %v1033
    %v1038 = vadd.f32 %v1003, %v1034
    %v1039 = vadd.f32 %v1004, %v1035
    %v1040 = vadd.f32 %v1005, %v1036
    %v1041 = vadd.f32 %v1006, %v1037
    %s1042 = scalar_lea.vmem [#allocation3], 104
    %v1043 = vld [vmem:[%s1042] sm:$0xf]
    %v1045 = vlaneseq
    %v1046 = vshrl.u32 %v1045, 7
    %v1047 = vsub.s32 0, %v1046
    %v1048 = vrot.slane %v1043, %v1047
    %v1049 = vlaneseq
    %v1050 = vshrl.u32 %v1049, 7
    %v1051 = vsub.s32 1, %v1050
    %v1052 = vrot.slane %v1043, %v1051
    %v1053 = vlaneseq
    %v1054 = vshrl.u32 %v1053, 7
    %v1055 = vsub.s32 2, %v1054
    %v1056 = vrot.slane %v1043, %v1055
    %v1057 = vlaneseq
    %v1058 = vshrl.u32 %v1057, 7
    %v1059 = vsub.s32 3, %v1058
    %v1060 = vrot.slane %v1043, %v1059
    %v1065 = vsub.f32 %v1048, %v55
    %v1066 = vsub.f32 %v1052, %v56
    %v1067 = vsub.f32 %v1056, %v57
    %v1068 = vsub.f32 %v1060, %v58
    %v1069 = vmul.f32 %v1065, %v1065
    %v1070 = vmul.f32 %v1066, %v1066
    %v1071 = vmul.f32 %v1067, %v1067
    %v1072 = vmul.f32 %v1068, %v1068
    %v1073 = vadd.f32 %v1038, %v1069
    %v1074 = vadd.f32 %v1039, %v1070
    %v1075 = vadd.f32 %v1040, %v1071
    %v1076 = vadd.f32 %v1041, %v1072
    %s1077 = scalar_lea.vmem [#allocation3], 108
    %v1078 = vld [vmem:[%s1077] sm:$0xf]
    %v1080 = vlaneseq
    %v1081 = vshrl.u32 %v1080, 7
    %v1082 = vsub.s32 0, %v1081
    %v1083 = vrot.slane %v1078, %v1082
    %v1084 = vlaneseq
    %v1085 = vshrl.u32 %v1084, 7
    %v1086 = vsub.s32 1, %v1085
    %v1087 = vrot.slane %v1078, %v1086
    %v1088 = vlaneseq
    %v1089 = vshrl.u32 %v1088, 7
    %v1090 = vsub.s32 2, %v1089
    %v1091 = vrot.slane %v1078, %v1090
    %v1092 = vlaneseq
    %v1093 = vshrl.u32 %v1092, 7
    %v1094 = vsub.s32 3, %v1093
    %v1095 = vrot.slane %v1078, %v1094
    %v1100 = vsub.f32 %v1083, %v60
    %v1101 = vsub.f32 %v1087, %v61
    %v1102 = vsub.f32 %v1091, %v62
    %v1103 = vsub.f32 %v1095, %v63
    %v1104 = vmul.f32 %v1100, %v1100
    %v1105 = vmul.f32 %v1101, %v1101
    %v1106 = vmul.f32 %v1102, %v1102
    %v1107 = vmul.f32 %v1103, %v1103
    %v1108 = vadd.f32 %v1073, %v1104
    %v1109 = vadd.f32 %v1074, %v1105
    %v1110 = vadd.f32 %v1075, %v1106
    %v1111 = vadd.f32 %v1076, %v1107
    %v1112 = vmul.f32 %v1108, %v199
    %v1113 = vmul.f32 %v1109, %v199
    %v1114 = vmul.f32 %v1110, %v199
    %v1115 = vmul.f32 %v1111, %v199
    %v1116 = vmul.f32 %v1112, 1.442695
    %v1117 = vpow.pop %v1116
    %v1118 = vmul.f32 %v1113, 1.442695
    %v1119 = vpow.pop %v1118
    %v1120 = vmul.f32 %v1114, 1.442695
    %v1121 = vpow.pop %v1120
    %v1122 = vmul.f32 %v1115, 1.442695
    %v1123 = vpow.pop %v1122
    %v1124 = vadd.f32 %v972, %v1117
    %v1125 = vadd.f32 %v973, %v1119
    %v1126 = vadd.f32 %v974, %v1121
    %v1127 = vadd.f32 %v975, %v1123
    %s1128 = scalar_lea.vmem [#allocation3], 112
    %v1129 = vld [vmem:[%s1128] sm:$0xf]
    %v1131 = vlaneseq
    %v1132 = vshrl.u32 %v1131, 7
    %v1133 = vsub.s32 0, %v1132
    %v1134 = vrot.slane %v1129, %v1133
    %v1135 = vlaneseq
    %v1136 = vshrl.u32 %v1135, 7
    %v1137 = vsub.s32 1, %v1136
    %v1138 = vrot.slane %v1129, %v1137
    %v1139 = vlaneseq
    %v1140 = vshrl.u32 %v1139, 7
    %v1141 = vsub.s32 2, %v1140
    %v1142 = vrot.slane %v1129, %v1141
    %v1143 = vlaneseq
    %v1144 = vshrl.u32 %v1143, 7
    %v1145 = vsub.s32 3, %v1144
    %v1146 = vrot.slane %v1129, %v1145
    %v1151 = vsub.f32 %v1134, %v45
    %v1152 = vsub.f32 %v1138, %v46
    %v1153 = vsub.f32 %v1142, %v47
    %v1154 = vsub.f32 %v1146, %v48
    %v1155 = vmul.f32 %v1151, %v1151
    %v1156 = vmul.f32 %v1152, %v1152
    %v1157 = vmul.f32 %v1153, %v1153
    %v1158 = vmul.f32 %v1154, %v1154
    %s1159 = scalar_lea.vmem [#allocation3], 116
    %v1160 = vld [vmem:[%s1159] sm:$0xf]
    %v1162 = vlaneseq
    %v1163 = vshrl.u32 %v1162, 7
    %v1164 = vsub.s32 0, %v1163
    %v1165 = vrot.slane %v1160, %v1164
    %v1166 = vlaneseq
    %v1167 = vshrl.u32 %v1166, 7
    %v1168 = vsub.s32 1, %v1167
    %v1169 = vrot.slane %v1160, %v1168
    %v1170 = vlaneseq
    %v1171 = vshrl.u32 %v1170, 7
    %v1172 = vsub.s32 2, %v1171
    %v1173 = vrot.slane %v1160, %v1172
    %v1174 = vlaneseq
    %v1175 = vshrl.u32 %v1174, 7
    %v1176 = vsub.s32 3, %v1175
    %v1177 = vrot.slane %v1160, %v1176
    %v1182 = vsub.f32 %v1165, %v50
    %v1183 = vsub.f32 %v1169, %v51
    %v1184 = vsub.f32 %v1173, %v52
    %v1185 = vsub.f32 %v1177, %v53
    %v1186 = vmul.f32 %v1182, %v1182
    %v1187 = vmul.f32 %v1183, %v1183
    %v1188 = vmul.f32 %v1184, %v1184
    %v1189 = vmul.f32 %v1185, %v1185
    %v1190 = vadd.f32 %v1155, %v1186
    %v1191 = vadd.f32 %v1156, %v1187
    %v1192 = vadd.f32 %v1157, %v1188
    %v1193 = vadd.f32 %v1158, %v1189
    %s1194 = scalar_lea.vmem [#allocation3], 120
    %v1195 = vld [vmem:[%s1194] sm:$0xf]
    %v1197 = vlaneseq
    %v1198 = vshrl.u32 %v1197, 7
    %v1199 = vsub.s32 0, %v1198
    %v1200 = vrot.slane %v1195, %v1199
    %v1201 = vlaneseq
    %v1202 = vshrl.u32 %v1201, 7
    %v1203 = vsub.s32 1, %v1202
    %v1204 = vrot.slane %v1195, %v1203
    %v1205 = vlaneseq
    %v1206 = vshrl.u32 %v1205, 7
    %v1207 = vsub.s32 2, %v1206
    %v1208 = vrot.slane %v1195, %v1207
    %v1209 = vlaneseq
    %v1210 = vshrl.u32 %v1209, 7
    %v1211 = vsub.s32 3, %v1210
    %v1212 = vrot.slane %v1195, %v1211
    %v1217 = vsub.f32 %v1200, %v55
    %v1218 = vsub.f32 %v1204, %v56
    %v1219 = vsub.f32 %v1208, %v57
    %v1220 = vsub.f32 %v1212, %v58
    %v1221 = vmul.f32 %v1217, %v1217
    %v1222 = vmul.f32 %v1218, %v1218
    %v1223 = vmul.f32 %v1219, %v1219
    %v1224 = vmul.f32 %v1220, %v1220
    %v1225 = vadd.f32 %v1190, %v1221
    %v1226 = vadd.f32 %v1191, %v1222
    %v1227 = vadd.f32 %v1192, %v1223
    %v1228 = vadd.f32 %v1193, %v1224
    %s1229 = scalar_lea.vmem [#allocation3], 124
    %v1230 = vld [vmem:[%s1229] sm:$0xf]
    %v1232 = vlaneseq
    %v1233 = vshrl.u32 %v1232, 7
    %v1234 = vsub.s32 0, %v1233
    %v1235 = vrot.slane %v1230, %v1234
    %v1236 = vlaneseq
    %v1237 = vshrl.u32 %v1236, 7
    %v1238 = vsub.s32 1, %v1237
    %v1239 = vrot.slane %v1230, %v1238
    %v1240 = vlaneseq
    %v1241 = vshrl.u32 %v1240, 7
    %v1242 = vsub.s32 2, %v1241
    %v1243 = vrot.slane %v1230, %v1242
    %v1244 = vlaneseq
    %v1245 = vshrl.u32 %v1244, 7
    %v1246 = vsub.s32 3, %v1245
    %v1247 = vrot.slane %v1230, %v1246
    %v1252 = vsub.f32 %v1235, %v60
    %v1253 = vsub.f32 %v1239, %v61
    %v1254 = vsub.f32 %v1243, %v62
    %v1255 = vsub.f32 %v1247, %v63
    %v1256 = vmul.f32 %v1252, %v1252
    %v1257 = vmul.f32 %v1253, %v1253
    %v1258 = vmul.f32 %v1254, %v1254
    %v1259 = vmul.f32 %v1255, %v1255
    %v1260 = vadd.f32 %v1225, %v1256
    %v1261 = vadd.f32 %v1226, %v1257
    %v1262 = vadd.f32 %v1227, %v1258
    %v1263 = vadd.f32 %v1228, %v1259
    %v1264 = vmul.f32 %v1260, %v199
    %v1265 = vmul.f32 %v1261, %v199
    %v1266 = vmul.f32 %v1262, %v199
    %v1267 = vmul.f32 %v1263, %v199
    %v1268 = vmul.f32 %v1264, 1.442695
    %v1269 = vpow.pop %v1268
    %v1270 = vmul.f32 %v1265, 1.442695
    %v1271 = vpow.pop %v1270
    %v1272 = vmul.f32 %v1266, 1.442695
    %v1273 = vpow.pop %v1272
    %v1274 = vmul.f32 %v1267, 1.442695
    %v1275 = vpow.pop %v1274
    %v1276 = vadd.f32 %v1124, %v1269
    %v1277 = vadd.f32 %v1125, %v1271
    %v1278 = vadd.f32 %v1126, %v1273
    %v1279 = vadd.f32 %v1127, %v1275
    %s1280 = scalar_lea.vmem [#allocation3], 128
    %v1281 = vld [vmem:[%s1280] sm:$0xf]
    %v1283 = vlaneseq
    %v1284 = vshrl.u32 %v1283, 7
    %v1285 = vsub.s32 0, %v1284
    %v1286 = vrot.slane %v1281, %v1285
    %v1287 = vlaneseq
    %v1288 = vshrl.u32 %v1287, 7
    %v1289 = vsub.s32 1, %v1288
    %v1290 = vrot.slane %v1281, %v1289
    %v1291 = vlaneseq
    %v1292 = vshrl.u32 %v1291, 7
    %v1293 = vsub.s32 2, %v1292
    %v1294 = vrot.slane %v1281, %v1293
    %v1295 = vlaneseq
    %v1296 = vshrl.u32 %v1295, 7
    %v1297 = vsub.s32 3, %v1296
    %v1298 = vrot.slane %v1281, %v1297
    %v1303 = vsub.f32 %v1286, %v45
    %v1304 = vsub.f32 %v1290, %v46
    %v1305 = vsub.f32 %v1294, %v47
    %v1306 = vsub.f32 %v1298, %v48
    %v1307 = vmul.f32 %v1303, %v1303
    %v1308 = vmul.f32 %v1304, %v1304
    %v1309 = vmul.f32 %v1305, %v1305
    %v1310 = vmul.f32 %v1306, %v1306
    %s1311 = scalar_lea.vmem [#allocation3], 132
    %v1312 = vld [vmem:[%s1311] sm:$0xf]
    %v1314 = vlaneseq
    %v1315 = vshrl.u32 %v1314, 7
    %v1316 = vsub.s32 0, %v1315
    %v1317 = vrot.slane %v1312, %v1316
    %v1318 = vlaneseq
    %v1319 = vshrl.u32 %v1318, 7
    %v1320 = vsub.s32 1, %v1319
    %v1321 = vrot.slane %v1312, %v1320
    %v1322 = vlaneseq
    %v1323 = vshrl.u32 %v1322, 7
    %v1324 = vsub.s32 2, %v1323
    %v1325 = vrot.slane %v1312, %v1324
    %v1326 = vlaneseq
    %v1327 = vshrl.u32 %v1326, 7
    %v1328 = vsub.s32 3, %v1327
    %v1329 = vrot.slane %v1312, %v1328
    %v1334 = vsub.f32 %v1317, %v50
    %v1335 = vsub.f32 %v1321, %v51
    %v1336 = vsub.f32 %v1325, %v52
    %v1337 = vsub.f32 %v1329, %v53
    %v1338 = vmul.f32 %v1334, %v1334
    %v1339 = vmul.f32 %v1335, %v1335
    %v1340 = vmul.f32 %v1336, %v1336
    %v1341 = vmul.f32 %v1337, %v1337
    %v1342 = vadd.f32 %v1307, %v1338
    %v1343 = vadd.f32 %v1308, %v1339
    %v1344 = vadd.f32 %v1309, %v1340
    %v1345 = vadd.f32 %v1310, %v1341
    %s1346 = scalar_lea.vmem [#allocation3], 136
    %v1347 = vld [vmem:[%s1346] sm:$0xf]
    %v1349 = vlaneseq
    %v1350 = vshrl.u32 %v1349, 7
    %v1351 = vsub.s32 0, %v1350
    %v1352 = vrot.slane %v1347, %v1351
    %v1353 = vlaneseq
    %v1354 = vshrl.u32 %v1353, 7
    %v1355 = vsub.s32 1, %v1354
    %v1356 = vrot.slane %v1347, %v1355
    %v1357 = vlaneseq
    %v1358 = vshrl.u32 %v1357, 7
    %v1359 = vsub.s32 2, %v1358
    %v1360 = vrot.slane %v1347, %v1359
    %v1361 = vlaneseq
    %v1362 = vshrl.u32 %v1361, 7
    %v1363 = vsub.s32 3, %v1362
    %v1364 = vrot.slane %v1347, %v1363
    %v1369 = vsub.f32 %v1352, %v55
    %v1370 = vsub.f32 %v1356, %v56
    %v1371 = vsub.f32 %v1360, %v57
    %v1372 = vsub.f32 %v1364, %v58
    %v1373 = vmul.f32 %v1369, %v1369
    %v1374 = vmul.f32 %v1370, %v1370
    %v1375 = vmul.f32 %v1371, %v1371
    %v1376 = vmul.f32 %v1372, %v1372
    %v1377 = vadd.f32 %v1342, %v1373
    %v1378 = vadd.f32 %v1343, %v1374
    %v1379 = vadd.f32 %v1344, %v1375
    %v1380 = vadd.f32 %v1345, %v1376
    %s1381 = scalar_lea.vmem [#allocation3], 140
    %v1382 = vld [vmem:[%s1381] sm:$0xf]
    %v1384 = vlaneseq
    %v1385 = vshrl.u32 %v1384, 7
    %v1386 = vsub.s32 0, %v1385
    %v1387 = vrot.slane %v1382, %v1386
    %v1388 = vlaneseq
    %v1389 = vshrl.u32 %v1388, 7
    %v1390 = vsub.s32 1, %v1389
    %v1391 = vrot.slane %v1382, %v1390
    %v1392 = vlaneseq
    %v1393 = vshrl.u32 %v1392, 7
    %v1394 = vsub.s32 2, %v1393
    %v1395 = vrot.slane %v1382, %v1394
    %v1396 = vlaneseq
    %v1397 = vshrl.u32 %v1396, 7
    %v1398 = vsub.s32 3, %v1397
    %v1399 = vrot.slane %v1382, %v1398
    %v1404 = vsub.f32 %v1387, %v60
    %v1405 = vsub.f32 %v1391, %v61
    %v1406 = vsub.f32 %v1395, %v62
    %v1407 = vsub.f32 %v1399, %v63
    %v1408 = vmul.f32 %v1404, %v1404
    %v1409 = vmul.f32 %v1405, %v1405
    %v1410 = vmul.f32 %v1406, %v1406
    %v1411 = vmul.f32 %v1407, %v1407
    %v1412 = vadd.f32 %v1377, %v1408
    %v1413 = vadd.f32 %v1378, %v1409
    %v1414 = vadd.f32 %v1379, %v1410
    %v1415 = vadd.f32 %v1380, %v1411
    %v1416 = vmul.f32 %v1412, %v199
    %v1417 = vmul.f32 %v1413, %v199
    %v1418 = vmul.f32 %v1414, %v199
    %v1419 = vmul.f32 %v1415, %v199
    %v1420 = vmul.f32 %v1416, 1.442695
    %v1421 = vpow.pop %v1420
    %v1422 = vmul.f32 %v1417, 1.442695
    %v1423 = vpow.pop %v1422
    %v1424 = vmul.f32 %v1418, 1.442695
    %v1425 = vpow.pop %v1424
    %v1426 = vmul.f32 %v1419, 1.442695
    %v1427 = vpow.pop %v1426
    %v1428 = vadd.f32 %v1276, %v1421
    %v1429 = vadd.f32 %v1277, %v1423
    %v1430 = vadd.f32 %v1278, %v1425
    %v1431 = vadd.f32 %v1279, %v1427
    %s1432 = scalar_lea.vmem [#allocation3], 144
    %v1433 = vld [vmem:[%s1432] sm:$0xf]
    %v1435 = vlaneseq
    %v1436 = vshrl.u32 %v1435, 7
    %v1437 = vsub.s32 0, %v1436
    %v1438 = vrot.slane %v1433, %v1437
    %v1439 = vlaneseq
    %v1440 = vshrl.u32 %v1439, 7
    %v1441 = vsub.s32 1, %v1440
    %v1442 = vrot.slane %v1433, %v1441
    %v1443 = vlaneseq
    %v1444 = vshrl.u32 %v1443, 7
    %v1445 = vsub.s32 2, %v1444
    %v1446 = vrot.slane %v1433, %v1445
    %v1447 = vlaneseq
    %v1448 = vshrl.u32 %v1447, 7
    %v1449 = vsub.s32 3, %v1448
    %v1450 = vrot.slane %v1433, %v1449
    %v1455 = vsub.f32 %v1438, %v45
    %v1456 = vsub.f32 %v1442, %v46
    %v1457 = vsub.f32 %v1446, %v47
    %v1458 = vsub.f32 %v1450, %v48
    %v1459 = vmul.f32 %v1455, %v1455
    %v1460 = vmul.f32 %v1456, %v1456
    %v1461 = vmul.f32 %v1457, %v1457
    %v1462 = vmul.f32 %v1458, %v1458
    %s1463 = scalar_lea.vmem [#allocation3], 148
    %v1464 = vld [vmem:[%s1463] sm:$0xf]
    %v1466 = vlaneseq
    %v1467 = vshrl.u32 %v1466, 7
    %v1468 = vsub.s32 0, %v1467
    %v1469 = vrot.slane %v1464, %v1468
    %v1470 = vlaneseq
    %v1471 = vshrl.u32 %v1470, 7
    %v1472 = vsub.s32 1, %v1471
    %v1473 = vrot.slane %v1464, %v1472
    %v1474 = vlaneseq
    %v1475 = vshrl.u32 %v1474, 7
    %v1476 = vsub.s32 2, %v1475
    %v1477 = vrot.slane %v1464, %v1476
    %v1478 = vlaneseq
    %v1479 = vshrl.u32 %v1478, 7
    %v1480 = vsub.s32 3, %v1479
    %v1481 = vrot.slane %v1464, %v1480
    %v1486 = vsub.f32 %v1469, %v50
    %v1487 = vsub.f32 %v1473, %v51
    %v1488 = vsub.f32 %v1477, %v52
    %v1489 = vsub.f32 %v1481, %v53
    %v1490 = vmul.f32 %v1486, %v1486
    %v1491 = vmul.f32 %v1487, %v1487
    %v1492 = vmul.f32 %v1488, %v1488
    %v1493 = vmul.f32 %v1489, %v1489
    %v1494 = vadd.f32 %v1459, %v1490
    %v1495 = vadd.f32 %v1460, %v1491
    %v1496 = vadd.f32 %v1461, %v1492
    %v1497 = vadd.f32 %v1462, %v1493
    %s1498 = scalar_lea.vmem [#allocation3], 152
    %v1499 = vld [vmem:[%s1498] sm:$0xf]
    %v1501 = vlaneseq
    %v1502 = vshrl.u32 %v1501, 7
    %v1503 = vsub.s32 0, %v1502
    %v1504 = vrot.slane %v1499, %v1503
    %v1505 = vlaneseq
    %v1506 = vshrl.u32 %v1505, 7
    %v1507 = vsub.s32 1, %v1506
    %v1508 = vrot.slane %v1499, %v1507
    %v1509 = vlaneseq
    %v1510 = vshrl.u32 %v1509, 7
    %v1511 = vsub.s32 2, %v1510
    %v1512 = vrot.slane %v1499, %v1511
    %v1513 = vlaneseq
    %v1514 = vshrl.u32 %v1513, 7
    %v1515 = vsub.s32 3, %v1514
    %v1516 = vrot.slane %v1499, %v1515
    %v1521 = vsub.f32 %v1504, %v55
    %v1522 = vsub.f32 %v1508, %v56
    %v1523 = vsub.f32 %v1512, %v57
    %v1524 = vsub.f32 %v1516, %v58
    %v1525 = vmul.f32 %v1521, %v1521
    %v1526 = vmul.f32 %v1522, %v1522
    %v1527 = vmul.f32 %v1523, %v1523
    %v1528 = vmul.f32 %v1524, %v1524
    %v1529 = vadd.f32 %v1494, %v1525
    %v1530 = vadd.f32 %v1495, %v1526
    %v1531 = vadd.f32 %v1496, %v1527
    %v1532 = vadd.f32 %v1497, %v1528
    %s1533 = scalar_lea.vmem [#allocation3], 156
    %v1534 = vld [vmem:[%s1533] sm:$0xf]
    %v1536 = vlaneseq
    %v1537 = vshrl.u32 %v1536, 7
    %v1538 = vsub.s32 0, %v1537
    %v1539 = vrot.slane %v1534, %v1538
    %v1540 = vlaneseq
    %v1541 = vshrl.u32 %v1540, 7
    %v1542 = vsub.s32 1, %v1541
    %v1543 = vrot.slane %v1534, %v1542
    %v1544 = vlaneseq
    %v1545 = vshrl.u32 %v1544, 7
    %v1546 = vsub.s32 2, %v1545
    %v1547 = vrot.slane %v1534, %v1546
    %v1548 = vlaneseq
    %v1549 = vshrl.u32 %v1548, 7
    %v1550 = vsub.s32 3, %v1549
    %v1551 = vrot.slane %v1534, %v1550
    %v1556 = vsub.f32 %v1539, %v60
    %v1557 = vsub.f32 %v1543, %v61
    %v1558 = vsub.f32 %v1547, %v62
    %v1559 = vsub.f32 %v1551, %v63
    %v1560 = vmul.f32 %v1556, %v1556
    %v1561 = vmul.f32 %v1557, %v1557
    %v1562 = vmul.f32 %v1558, %v1558
    %v1563 = vmul.f32 %v1559, %v1559
    %v1564 = vadd.f32 %v1529, %v1560
    %v1565 = vadd.f32 %v1530, %v1561
    %v1566 = vadd.f32 %v1531, %v1562
    %v1567 = vadd.f32 %v1532, %v1563
    %v1568 = vmul.f32 %v1564, %v199
    %v1569 = vmul.f32 %v1565, %v199
    %v1570 = vmul.f32 %v1566, %v199
    %v1571 = vmul.f32 %v1567, %v199
    %v1572 = vmul.f32 %v1568, 1.442695
    %v1573 = vpow.pop %v1572
    %v1574 = vmul.f32 %v1569, 1.442695
    %v1575 = vpow.pop %v1574
    %v1576 = vmul.f32 %v1570, 1.442695
    %v1577 = vpow.pop %v1576
    %v1578 = vmul.f32 %v1571, 1.442695
    %v1579 = vpow.pop %v1578
    %v1580 = vadd.f32 %v1428, %v1573
    %v1581 = vadd.f32 %v1429, %v1575
    %v1582 = vadd.f32 %v1430, %v1577
    %v1583 = vadd.f32 %v1431, %v1579
    %s1584 = scalar_lea.vmem [#allocation3], 160
    %v1585 = vld [vmem:[%s1584] sm:$0xf]
    %v1587 = vlaneseq
    %v1588 = vshrl.u32 %v1587, 7
    %v1589 = vsub.s32 0, %v1588
    %v1590 = vrot.slane %v1585, %v1589
    %v1591 = vlaneseq
    %v1592 = vshrl.u32 %v1591, 7
    %v1593 = vsub.s32 1, %v1592
    %v1594 = vrot.slane %v1585, %v1593
    %v1595 = vlaneseq
    %v1596 = vshrl.u32 %v1595, 7
    %v1597 = vsub.s32 2, %v1596
    %v1598 = vrot.slane %v1585, %v1597
    %v1599 = vlaneseq
    %v1600 = vshrl.u32 %v1599, 7
    %v1601 = vsub.s32 3, %v1600
    %v1602 = vrot.slane %v1585, %v1601
    %v1607 = vsub.f32 %v1590, %v45
    %v1608 = vsub.f32 %v1594, %v46
    %v1609 = vsub.f32 %v1598, %v47
    %v1610 = vsub.f32 %v1602, %v48
    %v1611 = vmul.f32 %v1607, %v1607
    %v1612 = vmul.f32 %v1608, %v1608
    %v1613 = vmul.f32 %v1609, %v1609
    %v1614 = vmul.f32 %v1610, %v1610
    %s1615 = scalar_lea.vmem [#allocation3], 164
    %v1616 = vld [vmem:[%s1615] sm:$0xf]
    %v1618 = vlaneseq
    %v1619 = vshrl.u32 %v1618, 7
    %v1620 = vsub.s32 0, %v1619
    %v1621 = vrot.slane %v1616, %v1620
    %v1622 = vlaneseq
    %v1623 = vshrl.u32 %v1622, 7
    %v1624 = vsub.s32 1, %v1623
    %v1625 = vrot.slane %v1616, %v1624
    %v1626 = vlaneseq
    %v1627 = vshrl.u32 %v1626, 7
    %v1628 = vsub.s32 2, %v1627
    %v1629 = vrot.slane %v1616, %v1628
    %v1630 = vlaneseq
    %v1631 = vshrl.u32 %v1630, 7
    %v1632 = vsub.s32 3, %v1631
    %v1633 = vrot.slane %v1616, %v1632
    %v1638 = vsub.f32 %v1621, %v50
    %v1639 = vsub.f32 %v1625, %v51
    %v1640 = vsub.f32 %v1629, %v52
    %v1641 = vsub.f32 %v1633, %v53
    %v1642 = vmul.f32 %v1638, %v1638
    %v1643 = vmul.f32 %v1639, %v1639
    %v1644 = vmul.f32 %v1640, %v1640
    %v1645 = vmul.f32 %v1641, %v1641
    %v1646 = vadd.f32 %v1611, %v1642
    %v1647 = vadd.f32 %v1612, %v1643
    %v1648 = vadd.f32 %v1613, %v1644
    %v1649 = vadd.f32 %v1614, %v1645
    %s1650 = scalar_lea.vmem [#allocation3], 168
    %v1651 = vld [vmem:[%s1650] sm:$0xf]
    %v1653 = vlaneseq
    %v1654 = vshrl.u32 %v1653, 7
    %v1655 = vsub.s32 0, %v1654
    %v1656 = vrot.slane %v1651, %v1655
    %v1657 = vlaneseq
    %v1658 = vshrl.u32 %v1657, 7
    %v1659 = vsub.s32 1, %v1658
    %v1660 = vrot.slane %v1651, %v1659
    %v1661 = vlaneseq
    %v1662 = vshrl.u32 %v1661, 7
    %v1663 = vsub.s32 2, %v1662
    %v1664 = vrot.slane %v1651, %v1663
    %v1665 = vlaneseq
    %v1666 = vshrl.u32 %v1665, 7
    %v1667 = vsub.s32 3, %v1666
    %v1668 = vrot.slane %v1651, %v1667
    %v1673 = vsub.f32 %v1656, %v55
    %v1674 = vsub.f32 %v1660, %v56
    %v1675 = vsub.f32 %v1664, %v57
    %v1676 = vsub.f32 %v1668, %v58
    %v1677 = vmul.f32 %v1673, %v1673
    %v1678 = vmul.f32 %v1674, %v1674
    %v1679 = vmul.f32 %v1675, %v1675
    %v1680 = vmul.f32 %v1676, %v1676
    %v1681 = vadd.f32 %v1646, %v1677
    %v1682 = vadd.f32 %v1647, %v1678
    %v1683 = vadd.f32 %v1648, %v1679
    %v1684 = vadd.f32 %v1649, %v1680
    %s1685 = scalar_lea.vmem [#allocation3], 172
    %v1686 = vld [vmem:[%s1685] sm:$0xf]
    %v1688 = vlaneseq
    %v1689 = vshrl.u32 %v1688, 7
    %v1690 = vsub.s32 0, %v1689
    %v1691 = vrot.slane %v1686, %v1690
    %v1692 = vlaneseq
    %v1693 = vshrl.u32 %v1692, 7
    %v1694 = vsub.s32 1, %v1693
    %v1695 = vrot.slane %v1686, %v1694
    %v1696 = vlaneseq
    %v1697 = vshrl.u32 %v1696, 7
    %v1698 = vsub.s32 2, %v1697
    %v1699 = vrot.slane %v1686, %v1698
    %v1700 = vlaneseq
    %v1701 = vshrl.u32 %v1700, 7
    %v1702 = vsub.s32 3, %v1701
    %v1703 = vrot.slane %v1686, %v1702
    %v1708 = vsub.f32 %v1691, %v60
    %v1709 = vsub.f32 %v1695, %v61
    %v1710 = vsub.f32 %v1699, %v62
    %v1711 = vsub.f32 %v1703, %v63
    %v1712 = vmul.f32 %v1708, %v1708
    %v1713 = vmul.f32 %v1709, %v1709
    %v1714 = vmul.f32 %v1710, %v1710
    %v1715 = vmul.f32 %v1711, %v1711
    %v1716 = vadd.f32 %v1681, %v1712
    %v1717 = vadd.f32 %v1682, %v1713
    %v1718 = vadd.f32 %v1683, %v1714
    %v1719 = vadd.f32 %v1684, %v1715
    %v1720 = vmul.f32 %v1716, %v199
    %v1721 = vmul.f32 %v1717, %v199
    %v1722 = vmul.f32 %v1718, %v199
    %v1723 = vmul.f32 %v1719, %v199
    %v1724 = vmul.f32 %v1720, 1.442695
    %v1725 = vpow.pop %v1724
    %v1726 = vmul.f32 %v1721, 1.442695
    %v1727 = vpow.pop %v1726
    %v1728 = vmul.f32 %v1722, 1.442695
    %v1729 = vpow.pop %v1728
    %v1730 = vmul.f32 %v1723, 1.442695
    %v1731 = vpow.pop %v1730
    %v1732 = vadd.f32 %v1580, %v1725
    %v1733 = vadd.f32 %v1581, %v1727
    %v1734 = vadd.f32 %v1582, %v1729
    %v1735 = vadd.f32 %v1583, %v1731
    %s1736 = scalar_lea.vmem [#allocation3], 176
    %v1737 = vld [vmem:[%s1736] sm:$0xf]
    %v1739 = vlaneseq
    %v1740 = vshrl.u32 %v1739, 7
    %v1741 = vsub.s32 0, %v1740
    %v1742 = vrot.slane %v1737, %v1741
    %v1743 = vlaneseq
    %v1744 = vshrl.u32 %v1743, 7
    %v1745 = vsub.s32 1, %v1744
    %v1746 = vrot.slane %v1737, %v1745
    %v1747 = vlaneseq
    %v1748 = vshrl.u32 %v1747, 7
    %v1749 = vsub.s32 2, %v1748
    %v1750 = vrot.slane %v1737, %v1749
    %v1751 = vlaneseq
    %v1752 = vshrl.u32 %v1751, 7
    %v1753 = vsub.s32 3, %v1752
    %v1754 = vrot.slane %v1737, %v1753
    %v1759 = vsub.f32 %v1742, %v45
    %v1760 = vsub.f32 %v1746, %v46
    %v1761 = vsub.f32 %v1750, %v47
    %v1762 = vsub.f32 %v1754, %v48
    %v1763 = vmul.f32 %v1759, %v1759
    %v1764 = vmul.f32 %v1760, %v1760
    %v1765 = vmul.f32 %v1761, %v1761
    %v1766 = vmul.f32 %v1762, %v1762
    %s1767 = scalar_lea.vmem [#allocation3], 180
    %v1768 = vld [vmem:[%s1767] sm:$0xf]
    %v1770 = vlaneseq
    %v1771 = vshrl.u32 %v1770, 7
    %v1772 = vsub.s32 0, %v1771
    %v1773 = vrot.slane %v1768, %v1772
    %v1774 = vlaneseq
    %v1775 = vshrl.u32 %v1774, 7
    %v1776 = vsub.s32 1, %v1775
    %v1777 = vrot.slane %v1768, %v1776
    %v1778 = vlaneseq
    %v1779 = vshrl.u32 %v1778, 7
    %v1780 = vsub.s32 2, %v1779
    %v1781 = vrot.slane %v1768, %v1780
    %v1782 = vlaneseq
    %v1783 = vshrl.u32 %v1782, 7
    %v1784 = vsub.s32 3, %v1783
    %v1785 = vrot.slane %v1768, %v1784
    %v1790 = vsub.f32 %v1773, %v50
    %v1791 = vsub.f32 %v1777, %v51
    %v1792 = vsub.f32 %v1781, %v52
    %v1793 = vsub.f32 %v1785, %v53
    %v1794 = vmul.f32 %v1790, %v1790
    %v1795 = vmul.f32 %v1791, %v1791
    %v1796 = vmul.f32 %v1792, %v1792
    %v1797 = vmul.f32 %v1793, %v1793
    %v1798 = vadd.f32 %v1763, %v1794
    %v1799 = vadd.f32 %v1764, %v1795
    %v1800 = vadd.f32 %v1765, %v1796
    %v1801 = vadd.f32 %v1766, %v1797
    %s1802 = scalar_lea.vmem [#allocation3], 184
    %v1803 = vld [vmem:[%s1802] sm:$0xf]
    %v1805 = vlaneseq
    %v1806 = vshrl.u32 %v1805, 7
    %v1807 = vsub.s32 0, %v1806
    %v1808 = vrot.slane %v1803, %v1807
    %v1809 = vlaneseq
    %v1810 = vshrl.u32 %v1809, 7
    %v1811 = vsub.s32 1, %v1810
    %v1812 = vrot.slane %v1803, %v1811
    %v1813 = vlaneseq
    %v1814 = vshrl.u32 %v1813, 7
    %v1815 = vsub.s32 2, %v1814
    %v1816 = vrot.slane %v1803, %v1815
    %v1817 = vlaneseq
    %v1818 = vshrl.u32 %v1817, 7
    %v1819 = vsub.s32 3, %v1818
    %v1820 = vrot.slane %v1803, %v1819
    %v1825 = vsub.f32 %v1808, %v55
    %v1826 = vsub.f32 %v1812, %v56
    %v1827 = vsub.f32 %v1816, %v57
    %v1828 = vsub.f32 %v1820, %v58
    %v1829 = vmul.f32 %v1825, %v1825
    %v1830 = vmul.f32 %v1826, %v1826
    %v1831 = vmul.f32 %v1827, %v1827
    %v1832 = vmul.f32 %v1828, %v1828
    %v1833 = vadd.f32 %v1798, %v1829
    %v1834 = vadd.f32 %v1799, %v1830
    %v1835 = vadd.f32 %v1800, %v1831
    %v1836 = vadd.f32 %v1801, %v1832
    %s1837 = scalar_lea.vmem [#allocation3], 188
    %v1838 = vld [vmem:[%s1837] sm:$0xf]
    %v1840 = vlaneseq
    %v1841 = vshrl.u32 %v1840, 7
    %v1842 = vsub.s32 0, %v1841
    %v1843 = vrot.slane %v1838, %v1842
    %v1844 = vlaneseq
    %v1845 = vshrl.u32 %v1844, 7
    %v1846 = vsub.s32 1, %v1845
    %v1847 = vrot.slane %v1838, %v1846
    %v1848 = vlaneseq
    %v1849 = vshrl.u32 %v1848, 7
    %v1850 = vsub.s32 2, %v1849
    %v1851 = vrot.slane %v1838, %v1850
    %v1852 = vlaneseq
    %v1853 = vshrl.u32 %v1852, 7
    %v1854 = vsub.s32 3, %v1853
    %v1855 = vrot.slane %v1838, %v1854
    %v1860 = vsub.f32 %v1843, %v60
    %v1861 = vsub.f32 %v1847, %v61
    %v1862 = vsub.f32 %v1851, %v62
    %v1863 = vsub.f32 %v1855, %v63
    %v1864 = vmul.f32 %v1860, %v1860
    %v1865 = vmul.f32 %v1861, %v1861
    %v1866 = vmul.f32 %v1862, %v1862
    %v1867 = vmul.f32 %v1863, %v1863
    %v1868 = vadd.f32 %v1833, %v1864
    %v1869 = vadd.f32 %v1834, %v1865
    %v1870 = vadd.f32 %v1835, %v1866
    %v1871 = vadd.f32 %v1836, %v1867
    %v1872 = vmul.f32 %v1868, %v199
    %v1873 = vmul.f32 %v1869, %v199
    %v1874 = vmul.f32 %v1870, %v199
    %v1875 = vmul.f32 %v1871, %v199
    %v1876 = vmul.f32 %v1872, 1.442695
    %v1877 = vpow.pop %v1876
    %v1878 = vmul.f32 %v1873, 1.442695
    %v1879 = vpow.pop %v1878
    %v1880 = vmul.f32 %v1874, 1.442695
    %v1881 = vpow.pop %v1880
    %v1882 = vmul.f32 %v1875, 1.442695
    %v1883 = vpow.pop %v1882
    %v1884 = vadd.f32 %v1732, %v1877
    %v1885 = vadd.f32 %v1733, %v1879
    %v1886 = vadd.f32 %v1734, %v1881
    %v1887 = vadd.f32 %v1735, %v1883
    %s1888 = scalar_lea.vmem [#allocation3], 192
    %v1889 = vld [vmem:[%s1888] sm:$0xf]
    %v1891 = vlaneseq
    %v1892 = vshrl.u32 %v1891, 7
    %v1893 = vsub.s32 0, %v1892
    %v1894 = vrot.slane %v1889, %v1893
    %v1895 = vlaneseq
    %v1896 = vshrl.u32 %v1895, 7
    %v1897 = vsub.s32 1, %v1896
    %v1898 = vrot.slane %v1889, %v1897
    %v1899 = vlaneseq
    %v1900 = vshrl.u32 %v1899, 7
    %v1901 = vsub.s32 2, %v1900
    %v1902 = vrot.slane %v1889, %v1901
    %v1903 = vlaneseq
    %v1904 = vshrl.u32 %v1903, 7
    %v1905 = vsub.s32 3, %v1904
    %v1906 = vrot.slane %v1889, %v1905
    %v1911 = vsub.f32 %v1894, %v45
    %v1912 = vsub.f32 %v1898, %v46
    %v1913 = vsub.f32 %v1902, %v47
    %v1914 = vsub.f32 %v1906, %v48
    %v1915 = vmul.f32 %v1911, %v1911
    %v1916 = vmul.f32 %v1912, %v1912
    %v1917 = vmul.f32 %v1913, %v1913
    %v1918 = vmul.f32 %v1914, %v1914
    %s1919 = scalar_lea.vmem [#allocation3], 196
    %v1920 = vld [vmem:[%s1919] sm:$0xf]
    %v1922 = vlaneseq
    %v1923 = vshrl.u32 %v1922, 7
    %v1924 = vsub.s32 0, %v1923
    %v1925 = vrot.slane %v1920, %v1924
    %v1926 = vlaneseq
    %v1927 = vshrl.u32 %v1926, 7
    %v1928 = vsub.s32 1, %v1927
    %v1929 = vrot.slane %v1920, %v1928
    %v1930 = vlaneseq
    %v1931 = vshrl.u32 %v1930, 7
    %v1932 = vsub.s32 2, %v1931
    %v1933 = vrot.slane %v1920, %v1932
    %v1934 = vlaneseq
    %v1935 = vshrl.u32 %v1934, 7
    %v1936 = vsub.s32 3, %v1935
    %v1937 = vrot.slane %v1920, %v1936
    %v1942 = vsub.f32 %v1925, %v50
    %v1943 = vsub.f32 %v1929, %v51
    %v1944 = vsub.f32 %v1933, %v52
    %v1945 = vsub.f32 %v1937, %v53
    %v1946 = vmul.f32 %v1942, %v1942
    %v1947 = vmul.f32 %v1943, %v1943
    %v1948 = vmul.f32 %v1944, %v1944
    %v1949 = vmul.f32 %v1945, %v1945
    %v1950 = vadd.f32 %v1915, %v1946
    %v1951 = vadd.f32 %v1916, %v1947
    %v1952 = vadd.f32 %v1917, %v1948
    %v1953 = vadd.f32 %v1918, %v1949
    %s1954 = scalar_lea.vmem [#allocation3], 200
    %v1955 = vld [vmem:[%s1954] sm:$0xf]
    %v1957 = vlaneseq
    %v1958 = vshrl.u32 %v1957, 7
    %v1959 = vsub.s32 0, %v1958
    %v1960 = vrot.slane %v1955, %v1959
    %v1961 = vlaneseq
    %v1962 = vshrl.u32 %v1961, 7
    %v1963 = vsub.s32 1, %v1962
    %v1964 = vrot.slane %v1955, %v1963
    %v1965 = vlaneseq
    %v1966 = vshrl.u32 %v1965, 7
    %v1967 = vsub.s32 2, %v1966
    %v1968 = vrot.slane %v1955, %v1967
    %v1969 = vlaneseq
    %v1970 = vshrl.u32 %v1969, 7
    %v1971 = vsub.s32 3, %v1970
    %v1972 = vrot.slane %v1955, %v1971
    %v1977 = vsub.f32 %v1960, %v55
    %v1978 = vsub.f32 %v1964, %v56
    %v1979 = vsub.f32 %v1968, %v57
    %v1980 = vsub.f32 %v1972, %v58
    %v1981 = vmul.f32 %v1977, %v1977
    %v1982 = vmul.f32 %v1978, %v1978
    %v1983 = vmul.f32 %v1979, %v1979
    %v1984 = vmul.f32 %v1980, %v1980
    %v1985 = vadd.f32 %v1950, %v1981
    %v1986 = vadd.f32 %v1951, %v1982
    %v1987 = vadd.f32 %v1952, %v1983
    %v1988 = vadd.f32 %v1953, %v1984
    %s1989 = scalar_lea.vmem [#allocation3], 204
    %v1990 = vld [vmem:[%s1989] sm:$0xf]
    %v1992 = vlaneseq
    %v1993 = vshrl.u32 %v1992, 7
    %v1994 = vsub.s32 0, %v1993
    %v1995 = vrot.slane %v1990, %v1994
    %v1996 = vlaneseq
    %v1997 = vshrl.u32 %v1996, 7
    %v1998 = vsub.s32 1, %v1997
    %v1999 = vrot.slane %v1990, %v1998
    %v2000 = vlaneseq
    %v2001 = vshrl.u32 %v2000, 7
    %v2002 = vsub.s32 2, %v2001
    %v2003 = vrot.slane %v1990, %v2002
    %v2004 = vlaneseq
    %v2005 = vshrl.u32 %v2004, 7
    %v2006 = vsub.s32 3, %v2005
    %v2007 = vrot.slane %v1990, %v2006
    %v2012 = vsub.f32 %v1995, %v60
    %v2013 = vsub.f32 %v1999, %v61
    %v2014 = vsub.f32 %v2003, %v62
    %v2015 = vsub.f32 %v2007, %v63
    %v2016 = vmul.f32 %v2012, %v2012
    %v2017 = vmul.f32 %v2013, %v2013
    %v2018 = vmul.f32 %v2014, %v2014
    %v2019 = vmul.f32 %v2015, %v2015
    %v2020 = vadd.f32 %v1985, %v2016
    %v2021 = vadd.f32 %v1986, %v2017
    %v2022 = vadd.f32 %v1987, %v2018
    %v2023 = vadd.f32 %v1988, %v2019
    %v2024 = vmul.f32 %v2020, %v199
    %v2025 = vmul.f32 %v2021, %v199
    %v2026 = vmul.f32 %v2022, %v199
    %v2027 = vmul.f32 %v2023, %v199
    %v2028 = vmul.f32 %v2024, 1.442695
    %v2029 = vpow.pop %v2028
    %v2030 = vmul.f32 %v2025, 1.442695
    %v2031 = vpow.pop %v2030
    %v2032 = vmul.f32 %v2026, 1.442695
    %v2033 = vpow.pop %v2032
    %v2034 = vmul.f32 %v2027, 1.442695
    %v2035 = vpow.pop %v2034
    %v2036 = vadd.f32 %v1884, %v2029
    %v2037 = vadd.f32 %v1885, %v2031
    %v2038 = vadd.f32 %v1886, %v2033
    %v2039 = vadd.f32 %v1887, %v2035
    %s2040 = scalar_lea.vmem [#allocation3], 208
    %v2041 = vld [vmem:[%s2040] sm:$0xf]
    %v2043 = vlaneseq
    %v2044 = vshrl.u32 %v2043, 7
    %v2045 = vsub.s32 0, %v2044
    %v2046 = vrot.slane %v2041, %v2045
    %v2047 = vlaneseq
    %v2048 = vshrl.u32 %v2047, 7
    %v2049 = vsub.s32 1, %v2048
    %v2050 = vrot.slane %v2041, %v2049
    %v2051 = vlaneseq
    %v2052 = vshrl.u32 %v2051, 7
    %v2053 = vsub.s32 2, %v2052
    %v2054 = vrot.slane %v2041, %v2053
    %v2055 = vlaneseq
    %v2056 = vshrl.u32 %v2055, 7
    %v2057 = vsub.s32 3, %v2056
    %v2058 = vrot.slane %v2041, %v2057
    %v2063 = vsub.f32 %v2046, %v45
    %v2064 = vsub.f32 %v2050, %v46
    %v2065 = vsub.f32 %v2054, %v47
    %v2066 = vsub.f32 %v2058, %v48
    %v2067 = vmul.f32 %v2063, %v2063
    %v2068 = vmul.f32 %v2064, %v2064
    %v2069 = vmul.f32 %v2065, %v2065
    %v2070 = vmul.f32 %v2066, %v2066
    %s2071 = scalar_lea.vmem [#allocation3], 212
    %v2072 = vld [vmem:[%s2071] sm:$0xf]
    %v2074 = vlaneseq
    %v2075 = vshrl.u32 %v2074, 7
    %v2076 = vsub.s32 0, %v2075
    %v2077 = vrot.slane %v2072, %v2076
    %v2078 = vlaneseq
    %v2079 = vshrl.u32 %v2078, 7
    %v2080 = vsub.s32 1, %v2079
    %v2081 = vrot.slane %v2072, %v2080
    %v2082 = vlaneseq
    %v2083 = vshrl.u32 %v2082, 7
    %v2084 = vsub.s32 2, %v2083
    %v2085 = vrot.slane %v2072, %v2084
    %v2086 = vlaneseq
    %v2087 = vshrl.u32 %v2086, 7
    %v2088 = vsub.s32 3, %v2087
    %v2089 = vrot.slane %v2072, %v2088
    %v2094 = vsub.f32 %v2077, %v50
    %v2095 = vsub.f32 %v2081, %v51
    %v2096 = vsub.f32 %v2085, %v52
    %v2097 = vsub.f32 %v2089, %v53
    %v2098 = vmul.f32 %v2094, %v2094
    %v2099 = vmul.f32 %v2095, %v2095
    %v2100 = vmul.f32 %v2096, %v2096
    %v2101 = vmul.f32 %v2097, %v2097
    %v2102 = vadd.f32 %v2067, %v2098
    %v2103 = vadd.f32 %v2068, %v2099
    %v2104 = vadd.f32 %v2069, %v2100
    %v2105 = vadd.f32 %v2070, %v2101
    %s2106 = scalar_lea.vmem [#allocation3], 216
    %v2107 = vld [vmem:[%s2106] sm:$0xf]
    %v2109 = vlaneseq
    %v2110 = vshrl.u32 %v2109, 7
    %v2111 = vsub.s32 0, %v2110
    %v2112 = vrot.slane %v2107, %v2111
    %v2113 = vlaneseq
    %v2114 = vshrl.u32 %v2113, 7
    %v2115 = vsub.s32 1, %v2114
    %v2116 = vrot.slane %v2107, %v2115
    %v2117 = vlaneseq
    %v2118 = vshrl.u32 %v2117, 7
    %v2119 = vsub.s32 2, %v2118
    %v2120 = vrot.slane %v2107, %v2119
    %v2121 = vlaneseq
    %v2122 = vshrl.u32 %v2121, 7
    %v2123 = vsub.s32 3, %v2122
    %v2124 = vrot.slane %v2107, %v2123
    %v2129 = vsub.f32 %v2112, %v55
    %v2130 = vsub.f32 %v2116, %v56
    %v2131 = vsub.f32 %v2120, %v57
    %v2132 = vsub.f32 %v2124, %v58
    %v2133 = vmul.f32 %v2129, %v2129
    %v2134 = vmul.f32 %v2130, %v2130
    %v2135 = vmul.f32 %v2131, %v2131
    %v2136 = vmul.f32 %v2132, %v2132
    %v2137 = vadd.f32 %v2102, %v2133
    %v2138 = vadd.f32 %v2103, %v2134
    %v2139 = vadd.f32 %v2104, %v2135
    %v2140 = vadd.f32 %v2105, %v2136
    %s2141 = scalar_lea.vmem [#allocation3], 220
    %v2142 = vld [vmem:[%s2141] sm:$0xf]
    %v2144 = vlaneseq
    %v2145 = vshrl.u32 %v2144, 7
    %v2146 = vsub.s32 0, %v2145
    %v2147 = vrot.slane %v2142, %v2146
    %v2148 = vlaneseq
    %v2149 = vshrl.u32 %v2148, 7
    %v2150 = vsub.s32 1, %v2149
    %v2151 = vrot.slane %v2142, %v2150
    %v2152 = vlaneseq
    %v2153 = vshrl.u32 %v2152, 7
    %v2154 = vsub.s32 2, %v2153
    %v2155 = vrot.slane %v2142, %v2154
    %v2156 = vlaneseq
    %v2157 = vshrl.u32 %v2156, 7
    %v2158 = vsub.s32 3, %v2157
    %v2159 = vrot.slane %v2142, %v2158
    %v2164 = vsub.f32 %v2147, %v60
    %v2165 = vsub.f32 %v2151, %v61
    %v2166 = vsub.f32 %v2155, %v62
    %v2167 = vsub.f32 %v2159, %v63
    %v2168 = vmul.f32 %v2164, %v2164
    %v2169 = vmul.f32 %v2165, %v2165
    %v2170 = vmul.f32 %v2166, %v2166
    %v2171 = vmul.f32 %v2167, %v2167
    %v2172 = vadd.f32 %v2137, %v2168
    %v2173 = vadd.f32 %v2138, %v2169
    %v2174 = vadd.f32 %v2139, %v2170
    %v2175 = vadd.f32 %v2140, %v2171
    %v2176 = vmul.f32 %v2172, %v199
    %v2177 = vmul.f32 %v2173, %v199
    %v2178 = vmul.f32 %v2174, %v199
    %v2179 = vmul.f32 %v2175, %v199
    %v2180 = vmul.f32 %v2176, 1.442695
    %v2181 = vpow.pop %v2180
    %v2182 = vmul.f32 %v2177, 1.442695
    %v2183 = vpow.pop %v2182
    %v2184 = vmul.f32 %v2178, 1.442695
    %v2185 = vpow.pop %v2184
    %v2186 = vmul.f32 %v2179, 1.442695
    %v2187 = vpow.pop %v2186
    %v2188 = vadd.f32 %v2036, %v2181
    %v2189 = vadd.f32 %v2037, %v2183
    %v2190 = vadd.f32 %v2038, %v2185
    %v2191 = vadd.f32 %v2039, %v2187
    %s2192 = scalar_lea.vmem [#allocation3], 224
    %v2193 = vld [vmem:[%s2192] sm:$0xf]
    %v2195 = vlaneseq
    %v2196 = vshrl.u32 %v2195, 7
    %v2197 = vsub.s32 0, %v2196
    %v2198 = vrot.slane %v2193, %v2197
    %v2199 = vlaneseq
    %v2200 = vshrl.u32 %v2199, 7
    %v2201 = vsub.s32 1, %v2200
    %v2202 = vrot.slane %v2193, %v2201
    %v2203 = vlaneseq
    %v2204 = vshrl.u32 %v2203, 7
    %v2205 = vsub.s32 2, %v2204
    %v2206 = vrot.slane %v2193, %v2205
    %v2207 = vlaneseq
    %v2208 = vshrl.u32 %v2207, 7
    %v2209 = vsub.s32 3, %v2208
    %v2210 = vrot.slane %v2193, %v2209
    %v2215 = vsub.f32 %v2198, %v45
    %v2216 = vsub.f32 %v2202, %v46
    %v2217 = vsub.f32 %v2206, %v47
    %v2218 = vsub.f32 %v2210, %v48
    %v2219 = vmul.f32 %v2215, %v2215
    %v2220 = vmul.f32 %v2216, %v2216
    %v2221 = vmul.f32 %v2217, %v2217
    %v2222 = vmul.f32 %v2218, %v2218
    %s2223 = scalar_lea.vmem [#allocation3], 228
    %v2224 = vld [vmem:[%s2223] sm:$0xf]
    %v2226 = vlaneseq
    %v2227 = vshrl.u32 %v2226, 7
    %v2228 = vsub.s32 0, %v2227
    %v2229 = vrot.slane %v2224, %v2228
    %v2230 = vlaneseq
    %v2231 = vshrl.u32 %v2230, 7
    %v2232 = vsub.s32 1, %v2231
    %v2233 = vrot.slane %v2224, %v2232
    %v2234 = vlaneseq
    %v2235 = vshrl.u32 %v2234, 7
    %v2236 = vsub.s32 2, %v2235
    %v2237 = vrot.slane %v2224, %v2236
    %v2238 = vlaneseq
    %v2239 = vshrl.u32 %v2238, 7
    %v2240 = vsub.s32 3, %v2239
    %v2241 = vrot.slane %v2224, %v2240
    %v2246 = vsub.f32 %v2229, %v50
    %v2247 = vsub.f32 %v2233, %v51
    %v2248 = vsub.f32 %v2237, %v52
    %v2249 = vsub.f32 %v2241, %v53
    %v2250 = vmul.f32 %v2246, %v2246
    %v2251 = vmul.f32 %v2247, %v2247
    %v2252 = vmul.f32 %v2248, %v2248
    %v2253 = vmul.f32 %v2249, %v2249
    %v2254 = vadd.f32 %v2219, %v2250
    %v2255 = vadd.f32 %v2220, %v2251
    %v2256 = vadd.f32 %v2221, %v2252
    %v2257 = vadd.f32 %v2222, %v2253
    %s2258 = scalar_lea.vmem [#allocation3], 232
    %v2259 = vld [vmem:[%s2258] sm:$0xf]
    %v2261 = vlaneseq
    %v2262 = vshrl.u32 %v2261, 7
    %v2263 = vsub.s32 0, %v2262
    %v2264 = vrot.slane %v2259, %v2263
    %v2265 = vlaneseq
    %v2266 = vshrl.u32 %v2265, 7
    %v2267 = vsub.s32 1, %v2266
    %v2268 = vrot.slane %v2259, %v2267
    %v2269 = vlaneseq
    %v2270 = vshrl.u32 %v2269, 7
    %v2271 = vsub.s32 2, %v2270
    %v2272 = vrot.slane %v2259, %v2271
    %v2273 = vlaneseq
    %v2274 = vshrl.u32 %v2273, 7
    %v2275 = vsub.s32 3, %v2274
    %v2276 = vrot.slane %v2259, %v2275
    %v2281 = vsub.f32 %v2264, %v55
    %v2282 = vsub.f32 %v2268, %v56
    %v2283 = vsub.f32 %v2272, %v57
    %v2284 = vsub.f32 %v2276, %v58
    %v2285 = vmul.f32 %v2281, %v2281
    %v2286 = vmul.f32 %v2282, %v2282
    %v2287 = vmul.f32 %v2283, %v2283
    %v2288 = vmul.f32 %v2284, %v2284
    %v2289 = vadd.f32 %v2254, %v2285
    %v2290 = vadd.f32 %v2255, %v2286
    %v2291 = vadd.f32 %v2256, %v2287
    %v2292 = vadd.f32 %v2257, %v2288
    %s2293 = scalar_lea.vmem [#allocation3], 236
    %v2294 = vld [vmem:[%s2293] sm:$0xf]
    %v2296 = vlaneseq
    %v2297 = vshrl.u32 %v2296, 7
    %v2298 = vsub.s32 0, %v2297
    %v2299 = vrot.slane %v2294, %v2298
    %v2300 = vlaneseq
    %v2301 = vshrl.u32 %v2300, 7
    %v2302 = vsub.s32 1, %v2301
    %v2303 = vrot.slane %v2294, %v2302
    %v2304 = vlaneseq
    %v2305 = vshrl.u32 %v2304, 7
    %v2306 = vsub.s32 2, %v2305
    %v2307 = vrot.slane %v2294, %v2306
    %v2308 = vlaneseq
    %v2309 = vshrl.u32 %v2308, 7
    %v2310 = vsub.s32 3, %v2309
    %v2311 = vrot.slane %v2294, %v2310
    %v2316 = vsub.f32 %v2299, %v60
    %v2317 = vsub.f32 %v2303, %v61
    %v2318 = vsub.f32 %v2307, %v62
    %v2319 = vsub.f32 %v2311, %v63
    %v2320 = vmul.f32 %v2316, %v2316
    %v2321 = vmul.f32 %v2317, %v2317
    %v2322 = vmul.f32 %v2318, %v2318
    %v2323 = vmul.f32 %v2319, %v2319
    %v2324 = vadd.f32 %v2289, %v2320
    %v2325 = vadd.f32 %v2290, %v2321
    %v2326 = vadd.f32 %v2291, %v2322
    %v2327 = vadd.f32 %v2292, %v2323
    %v2328 = vmul.f32 %v2324, %v199
    %v2329 = vmul.f32 %v2325, %v199
    %v2330 = vmul.f32 %v2326, %v199
    %v2331 = vmul.f32 %v2327, %v199
    %v2332 = vmul.f32 %v2328, 1.442695
    %v2333 = vpow.pop %v2332
    %v2334 = vmul.f32 %v2329, 1.442695
    %v2335 = vpow.pop %v2334
    %v2336 = vmul.f32 %v2330, 1.442695
    %v2337 = vpow.pop %v2336
    %v2338 = vmul.f32 %v2331, 1.442695
    %v2339 = vpow.pop %v2338
    %v2340 = vadd.f32 %v2188, %v2333
    %v2341 = vadd.f32 %v2189, %v2335
    %v2342 = vadd.f32 %v2190, %v2337
    %v2343 = vadd.f32 %v2191, %v2339
    %s2344 = scalar_lea.vmem [#allocation3], 240
    %v2345 = vld [vmem:[%s2344] sm:$0xf]
    %v2347 = vlaneseq
    %v2348 = vshrl.u32 %v2347, 7
    %v2349 = vsub.s32 0, %v2348
    %v2350 = vrot.slane %v2345, %v2349
    %v2351 = vlaneseq
    %v2352 = vshrl.u32 %v2351, 7
    %v2353 = vsub.s32 1, %v2352
    %v2354 = vrot.slane %v2345, %v2353
    %v2355 = vlaneseq
    %v2356 = vshrl.u32 %v2355, 7
    %v2357 = vsub.s32 2, %v2356
    %v2358 = vrot.slane %v2345, %v2357
    %v2359 = vlaneseq
    %v2360 = vshrl.u32 %v2359, 7
    %v2361 = vsub.s32 3, %v2360
    %v2362 = vrot.slane %v2345, %v2361
    %v2367 = vsub.f32 %v2350, %v45
    %v2368 = vsub.f32 %v2354, %v46
    %v2369 = vsub.f32 %v2358, %v47
    %v2370 = vsub.f32 %v2362, %v48
    %v2371 = vmul.f32 %v2367, %v2367
    %v2372 = vmul.f32 %v2368, %v2368
    %v2373 = vmul.f32 %v2369, %v2369
    %v2374 = vmul.f32 %v2370, %v2370
    %s2375 = scalar_lea.vmem [#allocation3], 244
    %v2376 = vld [vmem:[%s2375] sm:$0xf]
    %v2378 = vlaneseq
    %v2379 = vshrl.u32 %v2378, 7
    %v2380 = vsub.s32 0, %v2379
    %v2381 = vrot.slane %v2376, %v2380
    %v2382 = vlaneseq
    %v2383 = vshrl.u32 %v2382, 7
    %v2384 = vsub.s32 1, %v2383
    %v2385 = vrot.slane %v2376, %v2384
    %v2386 = vlaneseq
    %v2387 = vshrl.u32 %v2386, 7
    %v2388 = vsub.s32 2, %v2387
    %v2389 = vrot.slane %v2376, %v2388
    %v2390 = vlaneseq
    %v2391 = vshrl.u32 %v2390, 7
    %v2392 = vsub.s32 3, %v2391
    %v2393 = vrot.slane %v2376, %v2392
    %v2398 = vsub.f32 %v2381, %v50
    %v2399 = vsub.f32 %v2385, %v51
    %v2400 = vsub.f32 %v2389, %v52
    %v2401 = vsub.f32 %v2393, %v53
    %v2402 = vmul.f32 %v2398, %v2398
    %v2403 = vmul.f32 %v2399, %v2399
    %v2404 = vmul.f32 %v2400, %v2400
    %v2405 = vmul.f32 %v2401, %v2401
    %v2406 = vadd.f32 %v2371, %v2402
    %v2407 = vadd.f32 %v2372, %v2403
    %v2408 = vadd.f32 %v2373, %v2404
    %v2409 = vadd.f32 %v2374, %v2405
    %s2410 = scalar_lea.vmem [#allocation3], 248
    %v2411 = vld [vmem:[%s2410] sm:$0xf]
    %v2413 = vlaneseq
    %v2414 = vshrl.u32 %v2413, 7
    %v2415 = vsub.s32 0, %v2414
    %v2416 = vrot.slane %v2411, %v2415
    %v2417 = vlaneseq
    %v2418 = vshrl.u32 %v2417, 7
    %v2419 = vsub.s32 1, %v2418
    %v2420 = vrot.slane %v2411, %v2419
    %v2421 = vlaneseq
    %v2422 = vshrl.u32 %v2421, 7
    %v2423 = vsub.s32 2, %v2422
    %v2424 = vrot.slane %v2411, %v2423
    %v2425 = vlaneseq
    %v2426 = vshrl.u32 %v2425, 7
    %v2427 = vsub.s32 3, %v2426
    %v2428 = vrot.slane %v2411, %v2427
    %v2433 = vsub.f32 %v2416, %v55
    %v2434 = vsub.f32 %v2420, %v56
    %v2435 = vsub.f32 %v2424, %v57
    %v2436 = vsub.f32 %v2428, %v58
    %v2437 = vmul.f32 %v2433, %v2433
    %v2438 = vmul.f32 %v2434, %v2434
    %v2439 = vmul.f32 %v2435, %v2435
    %v2440 = vmul.f32 %v2436, %v2436
    %v2441 = vadd.f32 %v2406, %v2437
    %v2442 = vadd.f32 %v2407, %v2438
    %v2443 = vadd.f32 %v2408, %v2439
    %v2444 = vadd.f32 %v2409, %v2440
    %s2445 = scalar_lea.vmem [#allocation3], 252
    %v2446 = vld [vmem:[%s2445] sm:$0xf]
    %v2448 = vlaneseq
    %v2449 = vshrl.u32 %v2448, 7
    %v2450 = vsub.s32 0, %v2449
    %v2451 = vrot.slane %v2446, %v2450
    %v2452 = vlaneseq
    %v2453 = vshrl.u32 %v2452, 7
    %v2454 = vsub.s32 1, %v2453
    %v2455 = vrot.slane %v2446, %v2454
    %v2456 = vlaneseq
    %v2457 = vshrl.u32 %v2456, 7
    %v2458 = vsub.s32 2, %v2457
    %v2459 = vrot.slane %v2446, %v2458
    %v2460 = vlaneseq
    %v2461 = vshrl.u32 %v2460, 7
    %v2462 = vsub.s32 3, %v2461
    %v2463 = vrot.slane %v2446, %v2462
    %v2468 = vsub.f32 %v2451, %v60
    %v2469 = vsub.f32 %v2455, %v61
    %v2470 = vsub.f32 %v2459, %v62
    %v2471 = vsub.f32 %v2463, %v63
    %v2472 = vmul.f32 %v2468, %v2468
    %v2473 = vmul.f32 %v2469, %v2469
    %v2474 = vmul.f32 %v2470, %v2470
    %v2475 = vmul.f32 %v2471, %v2471
    %v2476 = vadd.f32 %v2441, %v2472
    %v2477 = vadd.f32 %v2442, %v2473
    %v2478 = vadd.f32 %v2443, %v2474
    %v2479 = vadd.f32 %v2444, %v2475
    %v2480 = vmul.f32 %v2476, %v199
    %v2481 = vmul.f32 %v2477, %v199
    %v2482 = vmul.f32 %v2478, %v199
    %v2483 = vmul.f32 %v2479, %v199
    %v2484 = vmul.f32 %v2480, 1.442695
    %v2485 = vpow.pop %v2484
    %v2486 = vmul.f32 %v2481, 1.442695
    %v2487 = vpow.pop %v2486
    %v2488 = vmul.f32 %v2482, 1.442695
    %v2489 = vpow.pop %v2488
    %v2490 = vmul.f32 %v2483, 1.442695
    %v2491 = vpow.pop %v2490
    %v2492 = vadd.f32 %v2340, %v2485
    %v2493 = vadd.f32 %v2341, %v2487
    %v2494 = vadd.f32 %v2342, %v2489
    %v2495 = vadd.f32 %v2343, %v2491
    %v2496 = vmul.f32 %v2492, 0.0625
    %v2497 = vmul.f32 %v2493, 0.0625
    %v2498 = vmul.f32 %v2494, 0.0625
    %v2499 = vmul.f32 %v2495, 0.0625
    %v2504 = vcombine.low %v2496, %v2497
    %v2505 = vcombine.high %v2496, %v2497
    %v2506 = vcombine.low %v2498, %v2499
    %v2507 = vcombine.high %v2498, %v2499
    %v2509 = vunpack.c.l.s4 1966171168
    %v2510 = vunpack.c.0.s8 %v2509
    %v2511 = vlaneseq
    %v2512 = vshrl.u32 %v2511, 7
    %v2513 = vsub.s32 %v2510, %v2512
    %v2514 = vrot.slane %v2504, %v2513
    %v2516 = vunpack.c.l.s4 1966171168
    %v2517 = vunpack.c.0.s8 %v2516
    %v2518 = vlaneseq
    %v2519 = vshrl.u32 %v2518, 7
    %v2520 = vsub.s32 %v2517, %v2519
    %v2521 = vrot.slane %v2505, %v2520
    %v2523 = vunpack.c.l.s4 1966171168
    %v2524 = vunpack.c.0.s8 %v2523
    %v2525 = vlaneseq
    %v2526 = vshrl.u32 %v2525, 7
    %v2527 = vsub.s32 %v2524, %v2526
    %v2528 = vrot.slane %v2506, %v2527
    %v2530 = vunpack.c.l.s4 1966171168
    %v2531 = vunpack.c.0.s8 %v2530
    %v2532 = vlaneseq
    %v2533 = vshrl.u32 %v2532, 7
    %v2534 = vsub.s32 %v2531, %v2533
    %v2535 = vrot.slane %v2507, %v2534
    %v2536 = vcombine.low %v2514, %v2528
    %v2537 = vcombine.high %v2514, %v2528
    %v2538 = vcombine.low %v2521, %v2535
    %v2539 = vcombine.high %v2521, %v2535
    %v2541 = vunpack.c.l.s4 1966171168
    %v2542 = vunpack.c.0.s8 %v2541
    %v2543 = vlaneseq
    %v2544 = vshrl.u32 %v2543, 7
    %v2545 = vsub.s32 %v2542, %v2544
    %v2546 = vrot.slane %v2536, %v2545
    %v2548 = vunpack.c.l.s4 1966171168
    %v2549 = vunpack.c.0.s8 %v2548
    %v2550 = vlaneseq
    %v2551 = vshrl.u32 %v2550, 7
    %v2552 = vsub.s32 %v2549, %v2551
    %v2553 = vrot.slane %v2538, %v2552
    %v2555 = vunpack.c.l.s4 1966171168
    %v2556 = vunpack.c.0.s8 %v2555
    %v2557 = vlaneseq
    %v2558 = vshrl.u32 %v2557, 7
    %v2559 = vsub.s32 %v2556, %v2558
    %v2560 = vrot.slane %v2537, %v2559
    %v2562 = vunpack.c.l.s4 1966171168
    %v2563 = vunpack.c.0.s8 %v2562
    %v2564 = vlaneseq
    %v2565 = vshrl.u32 %v2564, 7
    %v2566 = vsub.s32 %v2563, %v2565
    %v2567 = vrot.slane %v2539, %v2566
    %v2568 = vcombine.high %v2546, %v2546
    %v2569 = vcombine.high %v2553, %v2553
    %v2570 = vcombine.high %v2560, %v2560
    %v2571 = vcombine.high %v2567, %v2567
    %v2580 = vlaneseq
    %vm2581 = vcmp.ge.s32.totalorder %v2580, 0
    %vm2582 = vcmp.lt.s32.totalorder %v2580, 512
    %vm2583 = vmand %vm2581, %vm2582
    %2584 = vst.msk [vmem:[#allocation8] sm:$0xf] %vm2583, %v2546
    %2585 = vst.msk [vmem:[#allocation8 + $0x4] sm:$0xf] %vm2583, %v2560
    %2586 = vst.msk [vmem:[#allocation8 + $0x8] sm:$0xf] %vm2583, %v2568
    %2587 = vst.msk [vmem:[#allocation8 + $0xc] sm:$0xf] %vm2583, %v2570
    %2588 = vst.msk [vmem:[#allocation8 + $0x10] sm:$0xf] %vm2583, %v2553
    %2589 = vst.msk [vmem:[#allocation8 + $0x14] sm:$0xf] %vm2583, %v2567
    %2590 = vst.msk [vmem:[#allocation8 + $0x18] sm:$0xf] %vm2583, %v2569
    %2591 = vst.msk [vmem:[#allocation8 + $0x1c] sm:$0xf] %vm2583, %v2571
    // Predicated region
    $region22: #{tpu_custom_call.1} parent=1 // pred_check
      _
    $region23: #{tpu_custom_call.1} parent=1 // pred_check_branch
      %2593 = sbr.rel (0) target = $region25
    $region24: #{tpu_custom_call.1} parent=1 // pred_region
      %s2595 = ssub.s32 512, 512
      %2596 = vsyncadd [#allocation5], %s2595
      %s2597 = sshll.u32 [#allocation8], 4
      %s2598 = int_to_ptr.vmem [resolvable:$true] %s2597
      %2603 = dma.vmem_to_hbm [thread:$0]  %s2598, 512, %s3, [#allocation5], 64, 64, 4
    $region25: #{tpu_custom_call.1} parent=1 // pred_fallthru
      _
    // Predicated region
    $region26: #{tpu_custom_call.1} parent=1 // pred_check
      _
    $region27: #{tpu_custom_call.1} parent=1 // pred_check_branch
      %2605 = sbr.rel (0) target = $region29
    $region28: #{tpu_custom_call.1} parent=1 // pred_region
      %2606 = dma.done [#allocation5], 512
    $region29: #{tpu_custom_call.1} parent=1 // pred_fallthru
      _
    %2607 = vsyncpa [#allocation4], 1
    %2608 = vsyncpa [#allocation7], 1
    %2609 = vsyncpa [#allocation5], 1

</llo_original>
